<compile_context>
chip_gen: v7x
topology: tpu7x:2x2x1
jax: 0.10.0
libtpu: 0.0.40
codegen_flags: <defaults>
</compile_context>

<pallas_src>
import functools

import jax
import jax.numpy as jnp
from jax.experimental import pallas as pl
from jax.experimental.pallas import tpu as pltpu

# Model hyperparameters (match the PyTorch VanillaVAE construction).
IN_DIM = 16
HIDDEN = [32, 32]
LATENT_DIM = 8
LOG_STD_CLIPS = (-4.0, 4.0)

# Weight slab feature axes are zero-padded to one lane tile (128) so every
# matmul is MXU-friendly; activations inside the kernel are full-width, but
# HBM-side x / noise / out stay narrow.
F_PAD = 128
# Packed layer order: e0, e1, fused-heads(mu|log_std), d0, d1, d2.
NUM_LAYERS = 6


def _round_up(x, m):
    return (x + m - 1) // m * m


def _cdiv(a, b):
    return (a + b - 1) // b


def _vae_kernel(x_ref, noise_ref, w_ref, b_ref, out_ref):
    """One batch tile of the full VAE forward (encode -> reparam -> decode)."""
    x = x_ref[...]                                   # (tB, IN_DIM) narrow load

    # ---- encoder: Linear + ReLU stack ----
    # K-padding lives in the weight slab; slice the real 16 rows (sublane-
    # aligned for f32) instead of lane-padding x in the wrapper.
    w0 = w_ref[0]
    h = jnp.maximum(
        jnp.dot(x, w0[:IN_DIM, :], preferred_element_type=jnp.float32)
        + b_ref[0], 0.0)
    h = jnp.maximum(
        jnp.dot(h, w_ref[1], preferred_element_type=jnp.float32) + b_ref[1], 0.0)

    # ---- fused mean / log_std heads: one matmul, then static splits ----
    # (The offset-8 log_std extract costs one XLU rotate per tile; XLU has
    #  slack here, so it is kept in exchange for halving the head matmuls.)
    heads = jnp.dot(h, w_ref[2], preferred_element_type=jnp.float32) + b_ref[2]
    mean = heads[:, :LATENT_DIM]                                     # (tB, 8)
    log_std = jnp.clip(heads[:, LATENT_DIM:2 * LATENT_DIM],
                       LOG_STD_CLIPS[0], LOG_STD_CLIPS[1])
    std = jnp.exp(log_std)                 # EUP work; co-issues under the MXU

    # ---- reparameterization: z = mean + std * eps ----
    eps = noise_ref[...]                                             # (tB, 8)
    z = mean + std * eps                                             # (tB, 8)

    # ---- decoder: Linear + ReLU stack, last layer linear ----
    w_d0 = w_ref[3]                        # only the first LATENT_DIM rows real
    d = jnp.maximum(
        jnp.dot(z, w_d0[:LATENT_DIM, :], preferred_element_type=jnp.float32)
        + b_ref[3], 0.0)
    d = jnp.maximum(
        jnp.dot(d, w_ref[4], preferred_element_type=jnp.float32) + b_ref[4], 0.0)
    recon = jnp.dot(d, w_ref[5], preferred_element_type=jnp.float32) + b_ref[5]

    # Narrow store: only the 16 real output lanes go back to HBM (8x less
    # writeback; the masked store cost hides under ample store-slot slack).
    out_ref[...] = recon[:, :IN_DIM].astype(out_ref.dtype)


def pack_params(params):
    """Pack all layer weights/biases into two zero-padded slabs (2 DMAs, not 14).

    NOTE: expects weights as (in, out).  Real PyTorch nn.Linear stores
    (out, in) — transpose imported checkpoints before packing.
    """
    w = jnp.zeros((NUM_LAYERS, F_PAD, F_PAD), jnp.float32)
    b = jnp.zeros((NUM_LAYERS, 1, F_PAD), jnp.float32)

    # Fuse the mean / log_std heads into one (hidden, 2*latent) weight.
    w_heads = jnp.concatenate([params["w_mu"], params["w_ls"]], axis=1)
    b_heads = jnp.concatenate(
        [params["b_mu"].reshape(-1), params["b_ls"].reshape(-1)])

    layers = [
        (params["w_e0"], params["b_e0"]),
        (params["w_e1"], params["b_e1"]),
        (w_heads, b_heads),
        (params["w_d0"], params["b_d0"]),
        (params["w_d1"], params["b_d1"]),
        (params["w_d2"], params["b_d2"]),
    ]
    for i, (wi, bi) in enumerate(layers):
        wi = wi.astype(jnp.float32)
        bi = bi.reshape(-1).astype(jnp.float32)
        w = w.at[i, :wi.shape[0], :wi.shape[1]].set(wi)
        b = b.at[i, 0, :bi.shape[0]].set(bi)
    return w, b


@functools.partial(jax.jit, static_argnames=("block_b",))
def vanilla_vae_forward(x, noise, w_stack, b_stack, *, block_b=1024):
    """x: (B, IN_DIM) f32, noise: (B, LATENT_DIM) f32, packed param slabs."""
    B, in_dim = x.shape
    lat = noise.shape[1]

    # Batch tile selection: as big as block_b allows (amortize per-step
    # overhead), multiple of 8 sublanes, and with >= 2 grid steps whenever the
    # batch allows it so v7x's two TensorCores both get work.
    b8 = _round_up(B, 8)
    steps = _cdiv(b8, min(block_b, b8))
    if steps == 1 and b8 >= 16:
        steps = 2
    bb = _round_up(_cdiv(b8, steps), 8)
    b_pad = _round_up(B, bb)

    # Only batch padding (if needed) — feature axes stay narrow in HBM.
    if b_pad != B:
        x_in = jnp.zeros((b_pad, in_dim), x.dtype).at[:B].set(x)
        n_in = jnp.zeros((b_pad, lat), noise.dtype).at[:B].set(noise)
    else:
        x_in, n_in = x, noise

    out = pl.pallas_call(
        _vae_kernel,
        out_shape=jax.ShapeDtypeStruct((b_pad, in_dim), jnp.float32),
        grid=(b_pad // bb,),
        in_specs=[
            # Narrow activation tiles: last dim equals the full array dim,
            # so the (8,128) divisibility rule does not apply.
            pl.BlockSpec((bb, in_dim), lambda i: (i, 0)),            # x tile
            pl.BlockSpec((bb, lat), lambda i: (i, 0)),               # noise tile
            # Constant block index -> weights/biases fetched once and kept
            # resident in VMEM across all batch-grid steps.
            pl.BlockSpec((NUM_LAYERS, F_PAD, F_PAD), lambda i: (0, 0, 0)),
            pl.BlockSpec((NUM_LAYERS, 1, F_PAD), lambda i: (0, 0, 0)),
        ],
        out_specs=pl.BlockSpec((bb, in_dim), lambda i: (i, 0)),
        compiler_params=pltpu.CompilerParams(
            dimension_semantics=("parallel",)),  # shard batch grid across TCs
    )(x_in, n_in, w_stack, b_stack)

    return out if b_pad == B else out[:B]


def _init_linear(key, din, dout):
    # Deterministic init roughly matching PyTorch's default uniform bound.
    kw, kb = jax.random.split(key)
    bound = 1.0 / jnp.sqrt(din)
    w = jax.random.uniform(kw, (din, dout), jnp.float32, -bound, bound)
    b = jax.random.uniform(kb, (dout,), jnp.float32, -bound, bound)
    return w, b


def init_params(key):
    keys = jax.random.split(key, 8)
    p = {}
    # encoder: in_dim -> HIDDEN[0] -> HIDDEN[1]
    p["w_e0"], p["b_e0"] = _init_linear(keys[0], IN_DIM, HIDDEN[0])
    p["w_e1"], p["b_e1"] = _init_linear(keys[1], HIDDEN[0], HIDDEN[1])
    # heads: HIDDEN[-1] -> latent
    p["w_mu"], p["b_mu"] = _init_linear(keys[2], HIDDEN[1], LATENT_DIM)
    p["w_ls"], p["b_ls"] = _init_linear(keys[3], HIDDEN[1], LATENT_DIM)
    # decoder: latent -> HIDDEN[1] -> HIDDEN[0] -> in_dim
    p["w_d0"], p["b_d0"] = _init_linear(keys[4], LATENT_DIM, HIDDEN[1])
    p["w_d1"], p["b_d1"] = _init_linear(keys[5], HIDDEN[1], HIDDEN[0])
    p["w_d2"], p["b_d2"] = _init_linear(keys[6], HIDDEN[0], IN_DIM)
    return p


def _reference_forward(x, noise, p):
    # Pure-JAX reference of the same forward pass (for correctness check).
    h = jax.nn.relu(x @ p["w_e0"] + p["b_e0"])
    h = jax.nn.relu(h @ p["w_e1"] + p["b_e1"])
    mean = h @ p["w_mu"] + p["b_mu"]
    log_std = jnp.clip(h @ p["w_ls"] + p["b_ls"], *LOG_STD_CLIPS)
    z = mean + jnp.exp(log_std) * noise
    d = jax.nn.relu(z @ p["w_d0"] + p["b_d0"])
    d = jax.nn.relu(d @ p["w_d1"] + p["b_d1"])
    return d @ p["w_d2"] + p["b_d2"]


if __name__ == "__main__":
    key = jax.random.PRNGKey(0)
    k_params, k_x, k_noise = jax.random.split(key, 3)

    params = init_params(k_params)
    w_stack, b_stack = pack_params(params)

    BATCH = 256  # small, but splits into two batch-grid steps (v7x guard)
    x = jax.random.normal(k_x, (BATCH, IN_DIM), jnp.float32)
    # torch.randn_like(std) equivalent: noise drawn outside the kernel so the
    # reparameterization stays deterministic/reproducible.
    noise = jax.random.normal(k_noise, (BATCH, LATENT_DIM), jnp.float32)

    out = vanilla_vae_forward(x, noise, w_stack, b_stack)
    out = jax.block_until_ready(out)

    ref = _reference_forward(x, noise, params)
    assert out.shape == (BATCH, IN_DIM)
    assert jnp.allclose(out, ref, atol=1e-4, rtol=1e-4), float(
        jnp.max(jnp.abs(out - ref)))

    print("KERNEL_OK")
</pallas_src>

<mosaic_0001>
module attributes {stable_mosaic.version = 11 : i64} {
  func.func @_vae_kernel(%arg0: i32, %arg1: memref<128x16xf32, #tpu.memory_space<vmem>>, %arg2: memref<128x8xf32, #tpu.memory_space<vmem>>, %arg3: memref<6x128x128xf32, #tpu.memory_space<vmem>>, %arg4: memref<6x1x128xf32, #tpu.memory_space<vmem>>, %arg5: memref<128x16xf32, #tpu.memory_space<vmem>>) attributes {dimension_semantics = [#tpu.dimension_semantics<parallel>], iteration_bounds = array<i64: 2>, scalar_prefetch = 0 : i64, scratch_operands = 0 : i64, tpu.core_type = #tpu.core_type<tc>, window_params = [{transform_indices = @transform_0, window_bounds = array<i64: 128, 16>}, {transform_indices = @transform_1, window_bounds = array<i64: 128, 8>}, {pipeline_mode = #tpu.pipeline_mode<synchronous>, transform_indices = @transform_2, window_bounds = array<i64: 6, 128, 128>}, {pipeline_mode = #tpu.pipeline_mode<synchronous>, transform_indices = @transform_3, window_bounds = array<i64: 6, 1, 128>}, {transform_indices = @transform_4, window_bounds = array<i64: 128, 16>}]} {
    %c0 = arith.constant 0 : index
    %c0_0 = arith.constant 0 : index
    %0 = vector.load %arg1[%c0, %c0_0] : memref<128x16xf32, #tpu.memory_space<vmem>>, vector<128x16xf32>
    %c0_1 = arith.constant 0 : index
    %c0_2 = arith.constant 0 : index
    %c0_3 = arith.constant 0 : index
    %1 = vector.load %arg3[%c0_1, %c0_2, %c0_3] : memref<6x128x128xf32, #tpu.memory_space<vmem>>, vector<1x128x128xf32>
    %2 = vector.shape_cast %1 : vector<1x128x128xf32> to vector<128x128xf32>
    %3 = vector.extract_strided_slice %2 {offsets = [0, 0], sizes = [16, 128], strides = [1, 1]} : vector<128x128xf32> to vector<16x128xf32>
    %cst = arith.constant dense<0.000000e+00> : vector<128x128xf32>
    %4 = tpu.matmul %0, %3, %cst {dimension_numbers = #tpu.dot_dimension_numbers<[1], [0], [0], [1], [0, 0, 1, 1], [], []>} : vector<128x16xf32>, vector<16x128xf32>, vector<128x128xf32> -> vector<128x128xf32>
    %c0_4 = arith.constant 0 : index
    %c0_5 = arith.constant 0 : index
    %c0_6 = arith.constant 0 : index
    %5 = vector.load %arg4[%c0_4, %c0_5, %c0_6] : memref<6x1x128xf32, #tpu.memory_space<vmem>>, vector<1x1x128xf32>
    %6 = vector.shape_cast %5 : vector<1x1x128xf32> to vector<1x128xf32>
    %7 = vector.broadcast %6 : vector<1x128xf32> to vector<128x128xf32>
    %8 = arith.addf %4, %7 : vector<128x128xf32>
    %cst_7 = arith.constant 0.000000e+00 : f32
    %9 = vector.broadcast %cst_7 : f32 to vector<128x128xf32>
    %10 = arith.maximumf %8, %9 : vector<128x128xf32>
    %c1 = arith.constant 1 : index
    %c0_8 = arith.constant 0 : index
    %c0_9 = arith.constant 0 : index
    %11 = vector.load %arg3[%c1, %c0_8, %c0_9] : memref<6x128x128xf32, #tpu.memory_space<vmem>>, vector<1x128x128xf32>
    %12 = vector.shape_cast %11 : vector<1x128x128xf32> to vector<128x128xf32>
    %cst_10 = arith.constant dense<0.000000e+00> : vector<128x128xf32>
    %13 = tpu.matmul %10, %12, %cst_10 {dimension_numbers = #tpu.dot_dimension_numbers<[1], [0], [0], [1], [0, 0, 1, 1], [], []>} : vector<128x128xf32>, vector<128x128xf32>, vector<128x128xf32> -> vector<128x128xf32>
    %c1_11 = arith.constant 1 : index
    %c0_12 = arith.constant 0 : index
    %c0_13 = arith.constant 0 : index
    %14 = vector.load %arg4[%c1_11, %c0_12, %c0_13] : memref<6x1x128xf32, #tpu.memory_space<vmem>>, vector<1x1x128xf32>
    %15 = vector.shape_cast %14 : vector<1x1x128xf32> to vector<1x128xf32>
    %16 = vector.broadcast %15 : vector<1x128xf32> to vector<128x128xf32>
    %17 = arith.addf %13, %16 : vector<128x128xf32>
    %cst_14 = arith.constant 0.000000e+00 : f32
    %18 = vector.broadcast %cst_14 : f32 to vector<128x128xf32>
    %19 = arith.maximumf %17, %18 : vector<128x128xf32>
    %c2 = arith.constant 2 : index
    %c0_15 = arith.constant 0 : index
    %c0_16 = arith.constant 0 : index
    %20 = vector.load %arg3[%c2, %c0_15, %c0_16] : memref<6x128x128xf32, #tpu.memory_space<vmem>>, vector<1x128x128xf32>
    %21 = vector.shape_cast %20 : vector<1x128x128xf32> to vector<128x128xf32>
    %cst_17 = arith.constant dense<0.000000e+00> : vector<128x128xf32>
    %22 = tpu.matmul %19, %21, %cst_17 {dimension_numbers = #tpu.dot_dimension_numbers<[1], [0], [0], [1], [0, 0, 1, 1], [], []>} : vector<128x128xf32>, vector<128x128xf32>, vector<128x128xf32> -> vector<128x128xf32>
    %c2_18 = arith.constant 2 : index
    %c0_19 = arith.constant 0 : index
    %c0_20 = arith.constant 0 : index
    %23 = vector.load %arg4[%c2_18, %c0_19, %c0_20] : memref<6x1x128xf32, #tpu.memory_space<vmem>>, vector<1x1x128xf32>
    %24 = vector.shape_cast %23 : vector<1x1x128xf32> to vector<1x128xf32>
    %25 = vector.broadcast %24 : vector<1x128xf32> to vector<128x128xf32>
    %26 = arith.addf %22, %25 : vector<128x128xf32>
    %27 = vector.extract_strided_slice %26 {offsets = [0, 0], sizes = [128, 8], strides = [1, 1]} : vector<128x128xf32> to vector<128x8xf32>
    %28 = vector.extract_strided_slice %26 {offsets = [0, 8], sizes = [128, 8], strides = [1, 1]} : vector<128x128xf32> to vector<128x8xf32>
    %cst_21 = arith.constant -4.000000e+00 : f32
    %cst_22 = arith.constant 4.000000e+00 : f32
    %29 = vector.broadcast %cst_21 : f32 to vector<128x8xf32>
    %30 = arith.maximumf %29, %28 : vector<128x8xf32>
    %31 = vector.broadcast %cst_22 : f32 to vector<128x8xf32>
    %32 = arith.minimumf %31, %30 : vector<128x8xf32>
    %33 = math.exp %32 : vector<128x8xf32>
    %c0_23 = arith.constant 0 : index
    %c0_24 = arith.constant 0 : index
    %34 = vector.load %arg2[%c0_23, %c0_24] : memref<128x8xf32, #tpu.memory_space<vmem>>, vector<128x8xf32>
    %35 = arith.mulf %33, %34 : vector<128x8xf32>
    %36 = arith.addf %27, %35 : vector<128x8xf32>
    %c3 = arith.constant 3 : index
    %c0_25 = arith.constant 0 : index
    %c0_26 = arith.constant 0 : index
    %37 = vector.load %arg3[%c3, %c0_25, %c0_26] : memref<6x128x128xf32, #tpu.memory_space<vmem>>, vector<1x128x128xf32>
    %38 = vector.shape_cast %37 : vector<1x128x128xf32> to vector<128x128xf32>
    %39 = vector.extract_strided_slice %38 {offsets = [0, 0], sizes = [8, 128], strides = [1, 1]} : vector<128x128xf32> to vector<8x128xf32>
    %cst_27 = arith.constant dense<0.000000e+00> : vector<128x128xf32>
    %40 = tpu.matmul %36, %39, %cst_27 {dimension_numbers = #tpu.dot_dimension_numbers<[1], [0], [0], [1], [0, 0, 1, 1], [], []>} : vector<128x8xf32>, vector<8x128xf32>, vector<128x128xf32> -> vector<128x128xf32>
    %c3_28 = arith.constant 3 : index
    %c0_29 = arith.constant 0 : index
    %c0_30 = arith.constant 0 : index
    %41 = vector.load %arg4[%c3_28, %c0_29, %c0_30] : memref<6x1x128xf32, #tpu.memory_space<vmem>>, vector<1x1x128xf32>
    %42 = vector.shape_cast %41 : vector<1x1x128xf32> to vector<1x128xf32>
    %43 = vector.broadcast %42 : vector<1x128xf32> to vector<128x128xf32>
    %44 = arith.addf %40, %43 : vector<128x128xf32>
    %cst_31 = arith.constant 0.000000e+00 : f32
    %45 = vector.broadcast %cst_31 : f32 to vector<128x128xf32>
    %46 = arith.maximumf %44, %45 : vector<128x128xf32>
    %c4 = arith.constant 4 : index
    %c0_32 = arith.constant 0 : index
    %c0_33 = arith.constant 0 : index
    %47 = vector.load %arg3[%c4, %c0_32, %c0_33] : memref<6x128x128xf32, #tpu.memory_space<vmem>>, vector<1x128x128xf32>
    %48 = vector.shape_cast %47 : vector<1x128x128xf32> to vector<128x128xf32>
    %cst_34 = arith.constant dense<0.000000e+00> : vector<128x128xf32>
    %49 = tpu.matmul %46, %48, %cst_34 {dimension_numbers = #tpu.dot_dimension_numbers<[1], [0], [0], [1], [0, 0, 1, 1], [], []>} : vector<128x128xf32>, vector<128x128xf32>, vector<128x128xf32> -> vector<128x128xf32>
    %c4_35 = arith.constant 4 : index
    %c0_36 = arith.constant 0 : index
    %c0_37 = arith.constant 0 : index
    %50 = vector.load %arg4[%c4_35, %c0_36, %c0_37] : memref<6x1x128xf32, #tpu.memory_space<vmem>>, vector<1x1x128xf32>
    %51 = vector.shape_cast %50 : vector<1x1x128xf32> to vector<1x128xf32>
    %52 = vector.broadcast %51 : vector<1x128xf32> to vector<128x128xf32>
    %53 = arith.addf %49, %52 : vector<128x128xf32>
    %cst_38 = arith.constant 0.000000e+00 : f32
    %54 = vector.broadcast %cst_38 : f32 to vector<128x128xf32>
    %55 = arith.maximumf %53, %54 : vector<128x128xf32>
    %c5 = arith.constant 5 : index
    %c0_39 = arith.constant 0 : index
    %c0_40 = arith.constant 0 : index
    %56 = vector.load %arg3[%c5, %c0_39, %c0_40] : memref<6x128x128xf32, #tpu.memory_space<vmem>>, vector<1x128x128xf32>
    %57 = vector.shape_cast %56 : vector<1x128x128xf32> to vector<128x128xf32>
    %cst_41 = arith.constant dense<0.000000e+00> : vector<128x128xf32>
    %58 = tpu.matmul %55, %57, %cst_41 {dimension_numbers = #tpu.dot_dimension_numbers<[1], [0], [0], [1], [0, 0, 1, 1], [], []>} : vector<128x128xf32>, vector<128x128xf32>, vector<128x128xf32> -> vector<128x128xf32>
    %c5_42 = arith.constant 5 : index
    %c0_43 = arith.constant 0 : index
    %c0_44 = arith.constant 0 : index
    %59 = vector.load %arg4[%c5_42, %c0_43, %c0_44] : memref<6x1x128xf32, #tpu.memory_space<vmem>>, vector<1x1x128xf32>
    %60 = vector.shape_cast %59 : vector<1x1x128xf32> to vector<1x128xf32>
    %61 = vector.broadcast %60 : vector<1x128xf32> to vector<128x128xf32>
    %62 = arith.addf %58, %61 : vector<128x128xf32>
    %63 = vector.extract_strided_slice %62 {offsets = [0, 0], sizes = [128, 16], strides = [1, 1]} : vector<128x128xf32> to vector<128x16xf32>
    %c0_45 = arith.constant 0 : index
    %c0_46 = arith.constant 0 : index
    %64 = vector.load %arg5[%c0_45, %c0_46] : memref<128x16xf32, #tpu.memory_space<vmem>>, vector<128x16xf32>
    tpu.vector_store %arg5[%c0_45, %c0_46], %63 {strides = array<i32>} : memref<128x16xf32, #tpu.memory_space<vmem>>, vector<128x16xf32>,
    return
  }
  func.func @transform_0(%arg0: i32) -> (i32, i32) {
    %c0_i32 = arith.constant 0 : i32
    %c0_i32_0 = arith.constant 0 : i32
    return %arg0, %c0_i32 : i32, i32
  }
  func.func @transform_1(%arg0: i32) -> (i32, i32) {
    %c0_i32 = arith.constant 0 : i32
    %c0_i32_0 = arith.constant 0 : i32
    return %arg0, %c0_i32 : i32, i32
  }
  func.func @transform_2(%arg0: i32) -> (i32, i32, i32) {
    %c0_i32 = arith.constant 0 : i32
    %c0_i32_0 = arith.constant 0 : i32
    %c0_i32_1 = arith.constant 0 : i32
    %c0_i32_2 = arith.constant 0 : i32
    return %c0_i32, %c0_i32_0, %c0_i32_1 : i32, i32, i32
  }
  func.func @transform_3(%arg0: i32) -> (i32, i32, i32) {
    %c0_i32 = arith.constant 0 : i32
    %c0_i32_0 = arith.constant 0 : i32
    %c0_i32_1 = arith.constant 0 : i32
    %c0_i32_2 = arith.constant 0 : i32
    return %c0_i32, %c0_i32_0, %c0_i32_1 : i32, i32, i32
  }
  func.func @transform_4(%arg0: i32) -> (i32, i32) {
    %c0_i32 = arith.constant 0 : i32
    %c0_i32_0 = arith.constant 0 : i32
    return %arg0, %c0_i32 : i32, i32
  }
}

</mosaic_0001>

<llo_original>
// kernel: vanilla_vae_forward.1
$region0: #{vanilla_vae_forward.1}
  #allocation0 [shape = 'u32[]', space=smem, size = 0x4, offset = 0x4, fixed_abs, tag = 'smem constant byte address 0x4 - core index']
  #allocation1 [shape = 'u32[144,128]{1,0:T(1,128)}', space=vmem, size = 0x12000, scoped, tag = 'internal scratch']
  %s0 = inlined_call_operand.vmem [shape: f32[256,16], index: 0, kind: input, shape index: {}]
  %s1 = inlined_call_operand.vmem [shape: f32[256,8], index: 1, kind: input, shape index: {}]
  %s2 = inlined_call_operand.hbm [shape: f32[6,128,128], index: 2, kind: input, shape index: {}]
  %s3 = inlined_call_operand.vmem [shape: f32[6,1,128], index: 3, kind: input, shape index: {}]
  %s4 = inlined_call_operand.vmem [shape: f32[256,16], index: 4, kind: output, shape index: {}]
  %s5 = sld [smem:[#allocation0]]
  $region53: #{vanilla_vae_forward.1} parent=0
    _
  %s7 = ssub.s32 1, %s5
  %s8 = scalar_select 0, %s7, %s5
  $region1: #{vanilla_vae_forward.1} parent=0
    #allocation2 [shape = 'u8[393216]{0}', space=vmem, size = 0x60000, scoped, tag = 'input window, operand 2, single buffered']
    #allocation3 [shape = 's32[2]{0}', space=sflag, size = 0x8, scoped, tag = 'scoped memory for vanilla_vae_forward.1']
    %9 = vsyncpa [#allocation3], 0
    loop: start=0, step=1, limit=4
    $region2: #{vanilla_vae_forward.1} parent=1 // loop_pre_header
      _
    $region3: #{vanilla_vae_forward.1} parent=1 // loop_header
      %s11 = sphi 0, %s15
      %p12 = scmp.ge.s32.totalorder %s11, 4
      %s21 = sphi 0, %s23
      %s24 = sphi 0, %s21
      %s25 = sphi 0, %s24
      %s41 = sphi 0, %s25
      %s47 = sphi 0, %s49
      %s50 = sphi 0, %s47
      %s51 = sphi 0, %s50
      %s67 = sphi 0, %s51
      %s71 = sphi 0, %s71
      %s73 = sphi 0, %s71
      %s74 = sphi 0, %s73
      %s88 = sphi 0, %s74
      %s92 = sphi 0, %s92
      %s94 = sphi 0, %s92
      %s95 = sphi 0, %s94
      %s109 = sphi 0, %s95
      %s115 = sphi 0, %s117
      %s118 = sphi 0, %s115
      %s119 = sphi 0, %s118
      %s135 = sphi 0, %s119
    $region4: #{vanilla_vae_forward.1} parent=1 // loop_header_branch
      %14 = sbr.rel (%p12) target = $region8
    $region5: #{vanilla_vae_forward.1} parent=1 // loop_body
      %s16 = ssub.s32 %s11, 1
      %s17 = ssub.s32 %s11, 2
      %s18 = sadd.s32 %s11, 1
      %s19 = ssub.s32 %s11, %s18
      %p20 = scmp.eq.s32.totalorder %s19, 0
      %s22 = sadd.s32 %s21, 1
      %s23 = scalar_select %p20, %s21, %s22
      %p26 = pneg %p20
      %p27 = scmp.eq.s32.totalorder %s11, 1
      %p28 = por %p26, %p27
      %p29 = scmp.ne.s32.totalorder %s21, %s24
      %p30 = scmp.eq.s32.totalorder %s11, 0
      %p31 = por %p29, %p30
      %p32 = scmp.ne.s32.totalorder %s21, %s24
      %p33 = scmp.eq.s32.totalorder %s16, 1
      %p34 = por %p32, %p33
      %p35 = scmp.ne.s32.totalorder %s24, %s25
      %p36 = scmp.eq.s32.totalorder %s16, 0
      %p37 = por %p35, %p36
      %p38 = scmp.ne.s32.totalorder %s24, %s25
      %p39 = scmp.eq.s32.totalorder %s17, 1
      %p40 = por %p38, %p39
      %p42 = scmp.ne.s32.totalorder %s25, %s41
      %p43 = scmp.eq.s32.totalorder %s17, 0
      %p44 = por %p42, %p43
      %s45 = ssub.s32 %s11, %s18
      %p46 = scmp.eq.s32.totalorder %s45, 0
      %s48 = sadd.s32 %s47, 1
      %s49 = scalar_select %p46, %s47, %s48
      %p52 = pneg %p46
      %p53 = scmp.eq.s32.totalorder %s11, 1
      %p54 = por %p52, %p53
      %p55 = scmp.ne.s32.totalorder %s47, %s50
      %p56 = scmp.eq.s32.totalorder %s11, 0
      %p57 = por %p55, %p56
      %p58 = scmp.ne.s32.totalorder %s47, %s50
      %p59 = scmp.eq.s32.totalorder %s16, 1
      %p60 = por %p58, %p59
      %p61 = scmp.ne.s32.totalorder %s50, %s51
      %p62 = scmp.eq.s32.totalorder %s16, 0
      %p63 = por %p61, %p62
      %p64 = scmp.ne.s32.totalorder %s50, %s51
      %p65 = scmp.eq.s32.totalorder %s17, 1
      %p66 = por %p64, %p65
      %p68 = scmp.ne.s32.totalorder %s51, %s67
      %p69 = scmp.eq.s32.totalorder %s17, 0
      %p70 = por %p68, %p69
      %s72 = sadd.s32 %s71, 1
      %p75 = scmp.eq.s32.totalorder %s11, 1
      %p76 = scmp.ne.s32.totalorder %s71, %s73
      %p77 = scmp.eq.s32.totalorder %s11, 0
      %p78 = por %p76, %p77
      %p79 = scmp.ne.s32.totalorder %s71, %s73
      %p80 = scmp.eq.s32.totalorder %s16, 1
      %p81 = por %p79, %p80
      %p82 = scmp.ne.s32.totalorder %s73, %s74
      %p83 = scmp.eq.s32.totalorder %s16, 0
      %p84 = por %p82, %p83
      %p85 = scmp.ne.s32.totalorder %s73, %s74
      %p86 = scmp.eq.s32.totalorder %s17, 1
      %p87 = por %p85, %p86
      %p89 = scmp.ne.s32.totalorder %s74, %s88
      %p90 = scmp.eq.s32.totalorder %s17, 0
      %p91 = por %p89, %p90
      %s93 = sadd.s32 %s92, 1
      %p96 = scmp.eq.s32.totalorder %s11, 1
      %p97 = scmp.ne.s32.totalorder %s92, %s94
      %p98 = scmp.eq.s32.totalorder %s11, 0
      %p99 = por %p97, %p98
      %p100 = scmp.ne.s32.totalorder %s92, %s94
      %p101 = scmp.eq.s32.totalorder %s16, 1
      %p102 = por %p100, %p101
      %p103 = scmp.ne.s32.totalorder %s94, %s95
      %p104 = scmp.eq.s32.totalorder %s16, 0
      %p105 = por %p103, %p104
      %p106 = scmp.ne.s32.totalorder %s94, %s95
      %p107 = scmp.eq.s32.totalorder %s17, 1
      %p108 = por %p106, %p107
      %p110 = scmp.ne.s32.totalorder %s95, %s109
      %p111 = scmp.eq.s32.totalorder %s17, 0
      %p112 = por %p110, %p111
      %s113 = ssub.s32 %s11, %s18
      %p114 = scmp.eq.s32.totalorder %s113, 0
      %s116 = sadd.s32 %s115, 1
      %s117 = scalar_select %p114, %s115, %s116
      %p120 = pneg %p114
      %p121 = scmp.eq.s32.totalorder %s11, 1
      %p122 = por %p120, %p121
      %p123 = scmp.ne.s32.totalorder %s115, %s118
      %p124 = scmp.eq.s32.totalorder %s11, 0
      %p125 = por %p123, %p124
      %p126 = scmp.ne.s32.totalorder %s115, %s118
      %p127 = scmp.eq.s32.totalorder %s16, 1
      %p128 = por %p126, %p127
      %p129 = scmp.ne.s32.totalorder %s118, %s119
      %p130 = scmp.eq.s32.totalorder %s16, 0
      %p131 = por %p129, %p130
      %p132 = scmp.ne.s32.totalorder %s118, %s119
      %p133 = scmp.eq.s32.totalorder %s17, 1
      %p134 = por %p132, %p133
      %p136 = scmp.ne.s32.totalorder %s119, %s135
      %p137 = scmp.eq.s32.totalorder %s17, 0
      %p138 = por %p136, %p137
      %p139 = scmp.le.s32.totalorder 1, %s11
      %p140 = scmp.lt.s32.totalorder %s11, 3
      %p141 = pnand %p139, %p140
      %p142 = pneg %p141
      // Predicated region
      $region9: #{vanilla_vae_forward.1} parent=5 // pred_check
        _
      $region10: #{vanilla_vae_forward.1} parent=5 // pred_check_branch
        %144 = sbr.rel (%p141) target = $region12
      $region11: #{vanilla_vae_forward.1} parent=5 // pred_region
        %s145 = ssub.s32 %s11, 1
        // Predicated region
        $region13: #{vanilla_vae_forward.1} parent=11 // pred_check
          %p146 = pneg %p84
        $region14: #{vanilla_vae_forward.1} parent=11 // pred_check_branch
          %148 = sbr.rel (%p146) target = $region16
        $region15: #{vanilla_vae_forward.1} parent=11 // pred_region
          %s150 = ssub.s32 12288, 12288
          %151 = vsyncadd [#allocation3], %s150
          %s152 = sshll.u32 [#allocation2], 4
          %s153 = int_to_ptr.vmem [resolvable:$true] %s152
          %158 = dma.hbm_to_vmem [thread:$0]  %s2, 12288, %s153, [#allocation3], 128, 128, 8
        $region16: #{vanilla_vae_forward.1} parent=11 // pred_fallthru
          _
        // Predicated region
        $region17: #{vanilla_vae_forward.1} parent=11 // pred_check
          %p159 = pneg %p105
        $region18: #{vanilla_vae_forward.1} parent=11 // pred_check_branch
          %161 = sbr.rel (%p159) target = $region20
        $region19: #{vanilla_vae_forward.1} parent=11 // pred_region
          _
        $region20: #{vanilla_vae_forward.1} parent=11 // pred_fallthru
          _
      $region12: #{vanilla_vae_forward.1} parent=5 // pred_fallthru
        _
      %p162 = scmp.lt.s32.totalorder %s11, 2
      // Predicated region
      $region21: #{vanilla_vae_forward.1} parent=5 // pred_check
        %p163 = pneg %p162
      $region22: #{vanilla_vae_forward.1} parent=5 // pred_check_branch
        %165 = sbr.rel (%p163) target = $region24
      $region23: #{vanilla_vae_forward.1} parent=5 // pred_region
        // Predicated region
        $region25: #{vanilla_vae_forward.1} parent=23 // pred_check
          %p166 = pneg %p31
        $region26: #{vanilla_vae_forward.1} parent=23 // pred_check_branch
          %168 = sbr.rel (%p166) target = $region28
        $region27: #{vanilla_vae_forward.1} parent=23 // pred_region
          %s169 = smul.u32 16, %s11
          %p170 = scmp.lt.s32.totalorder %s169, 31
          %s171 = scalar_select %p170, %s169, 31
          %s172 = smul.addr %s171, 8
          %s173 = scalar_lea.vmem %s0, %s172
          %s174 = smul.u32 16, %s11
        $region28: #{vanilla_vae_forward.1} parent=23 // pred_fallthru
          _
        // Predicated region
        $region29: #{vanilla_vae_forward.1} parent=23 // pred_check
          %p175 = pneg %p57
        $region30: #{vanilla_vae_forward.1} parent=23 // pred_check_branch
          %177 = sbr.rel (%p175) target = $region32
        $region31: #{vanilla_vae_forward.1} parent=23 // pred_region
          %s178 = smul.u32 16, %s11
          %p179 = scmp.lt.s32.totalorder %s178, 31
          %s180 = scalar_select %p179, %s178, 31
          %s181 = smul.addr %s180, 8
          %s182 = scalar_lea.vmem %s1, %s181
          %s183 = smul.u32 16, %s11
        $region32: #{vanilla_vae_forward.1} parent=23 // pred_fallthru
          _
      $region24: #{vanilla_vae_forward.1} parent=5 // pred_fallthru
        _
      %p184 = scmp.le.s32.totalorder 1, %s11
      %p185 = scmp.lt.s32.totalorder %s11, 3
      %p186 = pnand %p184, %p185
      %p187 = pneg %p186
      // Predicated region
      $region33: #{vanilla_vae_forward.1} parent=5 // pred_check
        _
      $region34: #{vanilla_vae_forward.1} parent=5 // pred_check_branch
        %189 = sbr.rel (%p186) target = $region36
      $region35: #{vanilla_vae_forward.1} parent=5 // pred_region
        %s190 = ssub.s32 %s11, 1
        // Predicated region
        $region37: #{vanilla_vae_forward.1} parent=35 // pred_check
          %p191 = pneg %p84
        $region38: #{vanilla_vae_forward.1} parent=35 // pred_check_branch
          %193 = sbr.rel (%p191) target = $region40
        $region39: #{vanilla_vae_forward.1} parent=35 // pred_region
          %194 = dma.done [#allocation3], 12288
        $region40: #{vanilla_vae_forward.1} parent=35 // pred_fallthru
          _
        %s195 = smul.u32 16, %s16
        %p196 = scmp.lt.s32.totalorder %s195, 31
        %s197 = scalar_select %p196, %s195, 31
        %s198 = smul.addr %s197, 8
        %s199 = scalar_lea.vmem %s0, %s198
        %p200 = pneg %p37
        %p201 = pneg %p34
        %s202 = smul.u32 16, %s16
        %p203 = scmp.lt.s32.totalorder %s202, 31
        %s204 = scalar_select %p203, %s202, 31
        %s205 = smul.addr %s204, 8
        %s206 = scalar_lea.vmem %s1, %s205
        %p207 = pneg %p63
        %p208 = pneg %p60
        %p209 = pneg %p84
        %p210 = pneg %p81
        %p211 = pneg %p105
        %p212 = pneg %p102
        %p213 = pneg %p131
        %p214 = pneg %p128
        %s215 = smul.u32 16, %s16
        %p216 = scmp.lt.s32.totalorder %s215, 31
        %s217 = scalar_select %p216, %s215, 31
        %s218 = smul.addr %s217, 8
        %s219 = scalar_lea.vmem %s4, %s218
        %s220 = smul.u32 16, %s16
        %p221 = scmp.lt.s32.totalorder %s220, 31
        %s222 = scalar_select %p221, %s220, 31
        %s223 = smul.addr %s222, 8
        %s224 = scalar_lea.vmem %s0, %s223
        %s225 = smul.u32 16, %s16
        %s226 = smul.u32 16, %s16
        %p227 = scmp.lt.s32.totalorder %s226, 31
        %s228 = scalar_select %p227, %s226, 31
        %s229 = smul.addr %s228, 8
        %s230 = scalar_lea.vmem %s1, %s229
        %s231 = smul.u32 16, %s16
        %s232 = smul.u32 16, %s16
        %p233 = scmp.lt.s32.totalorder %s232, 31
        %s234 = scalar_select %p233, %s232, 31
        %s235 = smul.addr %s234, 8
        %s236 = scalar_lea.vmem %s4, %s235
        %s237 = smul.u32 16, %s16
        %v238 = vld [vmem:[%s224] sm:$0xff]
        %v239 = vld [vmem:[%s224 + $0x8] sm:$0xff]
        %v240 = vld [vmem:[%s224 + $0x10] sm:$0xff]
        %v241 = vld [vmem:[%s224 + $0x18] sm:$0xff]
        %v242 = vld [vmem:[%s224 + $0x20] sm:$0xff]
        %v243 = vld [vmem:[%s224 + $0x28] sm:$0xff]
        %v244 = vld [vmem:[%s224 + $0x30] sm:$0xff]
        %v245 = vld [vmem:[%s224 + $0x38] sm:$0xff]
        %v246 = vld [vmem:[%s224 + $0x40] sm:$0xff]
        %v247 = vld [vmem:[%s224 + $0x48] sm:$0xff]
        %v248 = vld [vmem:[%s224 + $0x50] sm:$0xff]
        %v249 = vld [vmem:[%s224 + $0x58] sm:$0xff]
        %v250 = vld [vmem:[%s224 + $0x60] sm:$0xff]
        %v251 = vld [vmem:[%s224 + $0x68] sm:$0xff]
        %v252 = vld [vmem:[%s224 + $0x70] sm:$0xff]
        %v253 = vld [vmem:[%s224 + $0x78] sm:$0xff]
        %v254 = vld [vmem:[#allocation2] sm:$0xff]
        %v255 = vld [vmem:[#allocation2 + $0x8] sm:$0xff]
        %v256 = vld [vmem:[%s3] sm:$0x1]
        %v258 = vlaneseq
        %v259 = vshrl.u32 %v258, 7
        %v260 = vsub.s32 0, %v259
        %v261 = vrot.slane %v256, %v260
        %vm263 = vcmask 130048
        %v265 = vsel %vm263, %v238, 0
        %v268 = vsel %vm263, %v239, 0
        %v271 = vsel %vm263, %v240, 0
        %v274 = vsel %vm263, %v241, 0
        %v277 = vsel %vm263, %v242, 0
        %v280 = vsel %vm263, %v243, 0
        %v283 = vsel %vm263, %v244, 0
        %v286 = vsel %vm263, %v245, 0
        %v289 = vsel %vm263, %v246, 0
        %v292 = vsel %vm263, %v247, 0
        %v295 = vsel %vm263, %v248, 0
        %v298 = vsel %vm263, %v249, 0
        %v301 = vsel %vm263, %v250, 0
        %v304 = vsel %vm263, %v251, 0
        %v307 = vsel %vm263, %v252, 0
        %v310 = vsel %vm263, %v253, 0
        %312 = vmatprep.subr.mxu0 0.0
        %313 = vmatpush1.msra.mxu0 %v254
        %314 = vmatprep.subr.mxu0 0.0
        %315 = vmatpush1.msra.mxu0 %v255
        %316 = vmatprep.subr.mxu0 0.0
        %317 = vmatpush1.msra.mxu0 0.0
        %318 = vmatprep.subr.mxu0 0.0
        %319 = vmatpush1.msra.mxu0 0.0
        %320 = vmatprep.subr.mxu0 0.0
        %321 = vmatpush1.msra.mxu0 0.0
        %322 = vmatprep.subr.mxu0 0.0
        %323 = vmatpush1.msra.mxu0 0.0
        %324 = vmatprep.subr.mxu0 0.0
        %325 = vmatpush1.msra.mxu0 0.0
        %326 = vmatprep.subr.mxu0 0.0
        %327 = vmatpush1.msra.mxu0 0.0
        %328 = vmatprep.subr.mxu0 0.0
        %329 = vmatpush1.msra.mxu0 0.0
        %330 = vmatprep.subr.mxu0 0.0
        %331 = vmatpush1.msra.mxu0 0.0
        %332 = vmatprep.subr.mxu0 0.0
        %333 = vmatpush1.msra.mxu0 0.0
        %334 = vmatprep.subr.mxu0 0.0
        %335 = vmatpush1.msra.mxu0 0.0
        %336 = vmatprep.subr.mxu0 0.0
        %337 = vmatpush1.msra.mxu0 0.0
        %338 = vmatprep.subr.mxu0 0.0
        %339 = vmatpush1.msra.mxu0 0.0
        %340 = vmatprep.subr.mxu0 0.0
        %341 = vmatpush1.msra.mxu0 0.0
        %342 = vmatprep.subr.mxu0 0.0
        %343 = vmatpush1.msra.mxu0 0.0
        %344 = vmatprep.subr.mxu0 0.0
        %345 = vmatpush1.msra.mxu0 0.0
        %346 = vmatprep.subr.mxu0 0.0
        %347 = vmatpush1.msra.mxu0 0.0
        %348 = vmatprep.subr.mxu0 0.0
        %349 = vmatpush1.msra.mxu0 0.0
        %350 = vmatprep.subr.mxu0 0.0
        %351 = vmatpush1.msra.mxu0 0.0
        %352 = vmatprep.subr.mxu0 0.0
        %353 = vmatpush1.msra.mxu0 0.0
        %354 = vmatprep.subr.mxu0 0.0
        %355 = vmatpush1.msra.mxu0 0.0
        %356 = vmatprep.subr.mxu0 0.0
        %357 = vmatpush1.msra.mxu0 0.0
        %358 = vmatprep.subr.mxu0 0.0
        %359 = vmatpush1.msra.mxu0 0.0
        %360 = vmatprep.subr.mxu0 0.0
        %361 = vmatpush1.msra.mxu0 0.0
        %362 = vmatprep.subr.mxu0 0.0
        %363 = vmatpush1.msra.mxu0 0.0
        %364 = vmatprep.subr.mxu0 0.0
        %365 = vmatpush1.msra.mxu0 0.0
        %366 = vmatprep.subr.mxu0 0.0
        %367 = vmatpush1.msra.mxu0 0.0
        %368 = vmatprep.subr.mxu0 0.0
        %369 = vmatpush1.msra.mxu0 0.0
        %370 = vmatprep.subr.mxu0 0.0
        %371 = vmatpush1.msra.mxu0 0.0
        %372 = vmatprep.subr.mxu0 0.0
        %373 = vmatpush1.msra.mxu0 0.0
        %374 = vmatprep.subr.mxu0 0.0
        %375 = vmatpush1.msra.mxu0 0.0
        %376 = vmatprep.mubr.f32.mxu0 0.0
        %377 = vmatmul.mubr.f32.gmra.mrb[0].mxu0 %v265
        %v378 = vpop.f32.mrb[0].mxu0
        %v379 = vadd.f32 %v261, %v378
        %v380 = vpop.f32.mrb[0].mxu0
        %381 = vmatprep.mubr.f32.mxu0 0.0
        %382 = vmatmul.mubr.f32.gmra.mrb[0].mxu0 %v268
        %v383 = vpop.f32.mrb[0].mxu0
        %v384 = vadd.f32 %v261, %v383
        %v385 = vpop.f32.mrb[0].mxu0
        %386 = vmatprep.mubr.f32.mxu0 0.0
        %387 = vmatmul.mubr.f32.gmra.mrb[0].mxu0 %v271
        %v388 = vpop.f32.mrb[0].mxu0
        %v389 = vadd.f32 %v261, %v388
        %v390 = vpop.f32.mrb[0].mxu0
        %391 = vmatprep.mubr.f32.mxu0 0.0
        %392 = vmatmul.mubr.f32.gmra.mrb[0].mxu0 %v274
        %v393 = vpop.f32.mrb[0].mxu0
        %v394 = vadd.f32 %v261, %v393
        %v395 = vpop.f32.mrb[0].mxu0
        %396 = vmatprep.mubr.f32.mxu0 0.0
        %397 = vmatmul.mubr.f32.gmra.mrb[0].mxu0 %v277
        %v398 = vpop.f32.mrb[0].mxu0
        %v399 = vadd.f32 %v261, %v398
        %v400 = vpop.f32.mrb[0].mxu0
        %401 = vmatprep.mubr.f32.mxu0 0.0
        %402 = vmatmul.mubr.f32.gmra.mrb[0].mxu0 %v280
        %v403 = vpop.f32.mrb[0].mxu0
        %v404 = vadd.f32 %v261, %v403
        %v405 = vpop.f32.mrb[0].mxu0
        %406 = vmatprep.mubr.f32.mxu0 0.0
        %407 = vmatmul.mubr.f32.gmra.mrb[0].mxu0 %v283
        %v408 = vpop.f32.mrb[0].mxu0
        %v409 = vadd.f32 %v261, %v408
        %v410 = vpop.f32.mrb[0].mxu0
        %411 = vmatprep.mubr.f32.mxu0 0.0
        %412 = vmatmul.mubr.f32.gmra.mrb[0].mxu0 %v286
        %v413 = vpop.f32.mrb[0].mxu0
        %v414 = vadd.f32 %v261, %v413
        %v415 = vpop.f32.mrb[0].mxu0
        %416 = vmatprep.mubr.f32.mxu0 0.0
        %417 = vmatmul.mubr.f32.gmra.mrb[0].mxu0 %v289
        %v418 = vpop.f32.mrb[0].mxu0
        %v419 = vadd.f32 %v261, %v418
        %v420 = vpop.f32.mrb[0].mxu0
        %421 = vmatprep.mubr.f32.mxu0 0.0
        %422 = vmatmul.mubr.f32.gmra.mrb[0].mxu0 %v292
        %v423 = vpop.f32.mrb[0].mxu0
        %v424 = vadd.f32 %v261, %v423
        %v425 = vpop.f32.mrb[0].mxu0
        %426 = vmatprep.mubr.f32.mxu0 0.0
        %427 = vmatmul.mubr.f32.gmra.mrb[0].mxu0 %v295
        %v428 = vpop.f32.mrb[0].mxu0
        %v429 = vadd.f32 %v261, %v428
        %v430 = vpop.f32.mrb[0].mxu0
        %431 = vmatprep.mubr.f32.mxu0 0.0
        %432 = vmatmul.mubr.f32.gmra.mrb[0].mxu0 %v298
        %v433 = vpop.f32.mrb[0].mxu0
        %v434 = vadd.f32 %v261, %v433
        %v435 = vpop.f32.mrb[0].mxu0
        %436 = vmatprep.mubr.f32.mxu0 0.0
        %437 = vmatmul.mubr.f32.gmra.mrb[0].mxu0 %v301
        %v438 = vpop.f32.mrb[0].mxu0
        %v439 = vadd.f32 %v261, %v438
        %v440 = vpop.f32.mrb[0].mxu0
        %441 = vmatprep.mubr.f32.mxu0 0.0
        %442 = vmatmul.mubr.f32.gmra.mrb[0].mxu0 %v304
        %v443 = vpop.f32.mrb[0].mxu0
        %v444 = vadd.f32 %v261, %v443
        %v445 = vpop.f32.mrb[0].mxu0
        %446 = vmatprep.mubr.f32.mxu0 0.0
        %447 = vmatmul.mubr.f32.gmra.mrb[0].mxu0 %v307
        %v448 = vpop.f32.mrb[0].mxu0
        %v449 = vadd.f32 %v261, %v448
        %v450 = vpop.f32.mrb[0].mxu0
        %451 = vmatprep.mubr.f32.mxu0 0.0
        %452 = vmatmul.mubr.f32.gmra.mrb[0].mxu0 %v310
        %v453 = vpop.f32.mrb[0].mxu0
        %v454 = vadd.f32 %v261, %v453
        %v455 = vpop.f32.mrb[0].mxu0
        %456 = vdwg.mxu0
        %v457 = vmax.f32 %v379, 0.0
        %v458 = vmax.f32 %v384, 0.0
        %v459 = vmax.f32 %v389, 0.0
        %v460 = vmax.f32 %v394, 0.0
        %v461 = vmax.f32 %v399, 0.0
        %v462 = vmax.f32 %v404, 0.0
        %v463 = vmax.f32 %v409, 0.0
        %v464 = vmax.f32 %v414, 0.0
        %v465 = vmax.f32 %v419, 0.0
        %v466 = vmax.f32 %v424, 0.0
        %v467 = vmax.f32 %v429, 0.0
        %v468 = vmax.f32 %v434, 0.0
        %v469 = vmax.f32 %v439, 0.0
        %v470 = vmax.f32 %v444, 0.0
        %v471 = vmax.f32 %v449, 0.0
        %v472 = vmax.f32 %v454, 0.0
        %s473 = scalar_lea.vmem [#allocation2], 128
        %v474 = vld [vmem:[%s473] sm:$0xff]
        %v475 = vld [vmem:[%s473 + $0x8] sm:$0xff]
        %v476 = vld [vmem:[%s473 + $0x10] sm:$0xff]
        %v477 = vld [vmem:[%s473 + $0x18] sm:$0xff]
        %v478 = vld [vmem:[%s473 + $0x20] sm:$0xff]
        %v479 = vld [vmem:[%s473 + $0x28] sm:$0xff]
        %v480 = vld [vmem:[%s473 + $0x30] sm:$0xff]
        %v481 = vld [vmem:[%s473 + $0x38] sm:$0xff]
        %v482 = vld [vmem:[%s473 + $0x40] sm:$0xff]
        %v483 = vld [vmem:[%s473 + $0x48] sm:$0xff]
        %v484 = vld [vmem:[%s473 + $0x50] sm:$0xff]
        %v485 = vld [vmem:[%s473 + $0x58] sm:$0xff]
        %v486 = vld [vmem:[%s473 + $0x60] sm:$0xff]
        %v487 = vld [vmem:[%s473 + $0x68] sm:$0xff]
        %v488 = vld [vmem:[%s473 + $0x70] sm:$0xff]
        %v489 = vld [vmem:[%s473 + $0x78] sm:$0xff]
        %s490 = scalar_lea.vmem %s3, 1
        %v491 = vld [vmem:[%s490] sm:$0x1]
        %v493 = vlaneseq
        %v494 = vshrl.u32 %v493, 7
        %v495 = vsub.s32 0, %v494
        %v496 = vrot.slane %v491, %v495
        %498 = vmatprep.subr.mxu0 0.0
        %499 = vmatpush1.msra.mxu0 %v474
        %500 = vmatprep.subr.mxu0 0.0
        %501 = vmatpush1.msra.mxu0 %v475
        %502 = vmatprep.subr.mxu0 0.0
        %503 = vmatpush1.msra.mxu0 %v476
        %504 = vmatprep.subr.mxu0 0.0
        %505 = vmatpush1.msra.mxu0 %v477
        %506 = vmatprep.subr.mxu0 0.0
        %507 = vmatpush1.msra.mxu0 %v478
        %508 = vmatprep.subr.mxu0 0.0
        %509 = vmatpush1.msra.mxu0 %v479
        %510 = vmatprep.subr.mxu0 0.0
        %511 = vmatpush1.msra.mxu0 %v480
        %512 = vmatprep.subr.mxu0 0.0
        %513 = vmatpush1.msra.mxu0 %v481
        %514 = vmatprep.subr.mxu0 0.0
        %515 = vmatpush1.msra.mxu0 %v482
        %516 = vmatprep.subr.mxu0 0.0
        %517 = vmatpush1.msra.mxu0 %v483
        %518 = vmatprep.subr.mxu0 0.0
        %519 = vmatpush1.msra.mxu0 %v484
        %520 = vmatprep.subr.mxu0 0.0
        %521 = vmatpush1.msra.mxu0 %v485
        %522 = vmatprep.subr.mxu0 0.0
        %523 = vmatpush1.msra.mxu0 %v486
        %524 = vmatprep.subr.mxu0 0.0
        %525 = vmatpush1.msra.mxu0 %v487
        %526 = vmatprep.subr.mxu0 0.0
        %527 = vmatpush1.msra.mxu0 %v488
        %528 = vmatprep.subr.mxu0 0.0
        %529 = vmatpush1.msra.mxu0 %v489
        %530 = vmatprep.subr.mxu0 0.0
        %531 = vmatpush1.msra.mxu0 0.0
        %532 = vmatprep.subr.mxu0 0.0
        %533 = vmatpush1.msra.mxu0 0.0
        %534 = vmatprep.subr.mxu0 0.0
        %535 = vmatpush1.msra.mxu0 0.0
        %536 = vmatprep.subr.mxu0 0.0
        %537 = vmatpush1.msra.mxu0 0.0
        %538 = vmatprep.subr.mxu0 0.0
        %539 = vmatpush1.msra.mxu0 0.0
        %540 = vmatprep.subr.mxu0 0.0
        %541 = vmatpush1.msra.mxu0 0.0
        %542 = vmatprep.subr.mxu0 0.0
        %543 = vmatpush1.msra.mxu0 0.0
        %544 = vmatprep.subr.mxu0 0.0
        %545 = vmatpush1.msra.mxu0 0.0
        %546 = vmatprep.subr.mxu0 0.0
        %547 = vmatpush1.msra.mxu0 0.0
        %548 = vmatprep.subr.mxu0 0.0
        %549 = vmatpush1.msra.mxu0 0.0
        %550 = vmatprep.subr.mxu0 0.0
        %551 = vmatpush1.msra.mxu0 0.0
        %552 = vmatprep.subr.mxu0 0.0
        %553 = vmatpush1.msra.mxu0 0.0
        %554 = vmatprep.subr.mxu0 0.0
        %555 = vmatpush1.msra.mxu0 0.0
        %556 = vmatprep.subr.mxu0 0.0
        %557 = vmatpush1.msra.mxu0 0.0
        %558 = vmatprep.subr.mxu0 0.0
        %559 = vmatpush1.msra.mxu0 0.0
        %560 = vmatprep.subr.mxu0 0.0
        %561 = vmatpush1.msra.mxu0 0.0
        %562 = vmatprep.mubr.f32.mxu0 0.0
        %563 = vmatmul.mubr.f32.gmra.mrb[0].mxu0 %v457
        %v564 = vpop.f32.mrb[0].mxu0
        %v565 = vadd.f32 %v496, %v564
        %v566 = vpop.f32.mrb[0].mxu0
        %567 = vmatprep.mubr.f32.mxu0 0.0
        %568 = vmatmul.mubr.f32.gmra.mrb[0].mxu0 %v458
        %v569 = vpop.f32.mrb[0].mxu0
        %v570 = vadd.f32 %v496, %v569
        %v571 = vpop.f32.mrb[0].mxu0
        %572 = vmatprep.mubr.f32.mxu0 0.0
        %573 = vmatmul.mubr.f32.gmra.mrb[0].mxu0 %v459
        %v574 = vpop.f32.mrb[0].mxu0
        %v575 = vadd.f32 %v496, %v574
        %v576 = vpop.f32.mrb[0].mxu0
        %577 = vmatprep.mubr.f32.mxu0 0.0
        %578 = vmatmul.mubr.f32.gmra.mrb[0].mxu0 %v460
        %v579 = vpop.f32.mrb[0].mxu0
        %v580 = vadd.f32 %v496, %v579
        %v581 = vpop.f32.mrb[0].mxu0
        %582 = vmatprep.mubr.f32.mxu0 0.0
        %583 = vmatmul.mubr.f32.gmra.mrb[0].mxu0 %v461
        %v584 = vpop.f32.mrb[0].mxu0
        %v585 = vadd.f32 %v496, %v584
        %v586 = vpop.f32.mrb[0].mxu0
        %587 = vmatprep.mubr.f32.mxu0 0.0
        %588 = vmatmul.mubr.f32.gmra.mrb[0].mxu0 %v462
        %v589 = vpop.f32.mrb[0].mxu0
        %v590 = vadd.f32 %v496, %v589
        %v591 = vpop.f32.mrb[0].mxu0
        %592 = vmatprep.mubr.f32.mxu0 0.0
        %593 = vmatmul.mubr.f32.gmra.mrb[0].mxu0 %v463
        %v594 = vpop.f32.mrb[0].mxu0
        %v595 = vadd.f32 %v496, %v594
        %v596 = vpop.f32.mrb[0].mxu0
        %597 = vmatprep.mubr.f32.mxu0 0.0
        %598 = vmatmul.mubr.f32.gmra.mrb[0].mxu0 %v464
        %v599 = vpop.f32.mrb[0].mxu0
        %v600 = vadd.f32 %v496, %v599
        %v601 = vpop.f32.mrb[0].mxu0
        %602 = vmatprep.mubr.f32.mxu0 0.0
        %603 = vmatmul.mubr.f32.gmra.mrb[0].mxu0 %v465
        %v604 = vpop.f32.mrb[0].mxu0
        %v605 = vadd.f32 %v496, %v604
        %v606 = vpop.f32.mrb[0].mxu0
        %607 = vmatprep.mubr.f32.mxu0 0.0
        %608 = vmatmul.mubr.f32.gmra.mrb[0].mxu0 %v466
        %v609 = vpop.f32.mrb[0].mxu0
        %v610 = vadd.f32 %v496, %v609
        %v611 = vpop.f32.mrb[0].mxu0
        %612 = vmatprep.mubr.f32.mxu0 0.0
        %613 = vmatmul.mubr.f32.gmra.mrb[0].mxu0 %v467
        %v614 = vpop.f32.mrb[0].mxu0
        %v615 = vadd.f32 %v496, %v614
        %v616 = vpop.f32.mrb[0].mxu0
        %617 = vmatprep.mubr.f32.mxu0 0.0
        %618 = vmatmul.mubr.f32.gmra.mrb[0].mxu0 %v468
        %v619 = vpop.f32.mrb[0].mxu0
        %v620 = vadd.f32 %v496, %v619
        %v621 = vpop.f32.mrb[0].mxu0
        %622 = vmatprep.mubr.f32.mxu0 0.0
        %623 = vmatmul.mubr.f32.gmra.mrb[0].mxu0 %v469
        %v624 = vpop.f32.mrb[0].mxu0
        %v625 = vadd.f32 %v496, %v624
        %v626 = vpop.f32.mrb[0].mxu0
        %627 = vmatprep.mubr.f32.mxu0 0.0
        %628 = vmatmul.mubr.f32.gmra.mrb[0].mxu0 %v470
        %v629 = vpop.f32.mrb[0].mxu0
        %v630 = vadd.f32 %v496, %v629
        %v631 = vpop.f32.mrb[0].mxu0
        %632 = vmatprep.mubr.f32.mxu0 0.0
        %633 = vmatmul.mubr.f32.gmra.mrb[0].mxu0 %v471
        %v634 = vpop.f32.mrb[0].mxu0
        %v635 = vadd.f32 %v496, %v634
        %v636 = vpop.f32.mrb[0].mxu0
        %637 = vmatprep.mubr.f32.mxu0 0.0
        %638 = vmatmul.mubr.f32.gmra.mrb[0].mxu0 %v472
        %v639 = vpop.f32.mrb[0].mxu0
        %v640 = vadd.f32 %v496, %v639
        %v641 = vpop.f32.mrb[0].mxu0
        %642 = vdwg.mxu0
        %v643 = vmax.f32 %v565, 0.0
        %v644 = vmax.f32 %v570, 0.0
        %v645 = vmax.f32 %v575, 0.0
        %v646 = vmax.f32 %v580, 0.0
        %v647 = vmax.f32 %v585, 0.0
        %v648 = vmax.f32 %v590, 0.0
        %v649 = vmax.f32 %v595, 0.0
        %v650 = vmax.f32 %v600, 0.0
        %v651 = vmax.f32 %v605, 0.0
        %v652 = vmax.f32 %v610, 0.0
        %v653 = vmax.f32 %v615, 0.0
        %v654 = vmax.f32 %v620, 0.0
        %v655 = vmax.f32 %v625, 0.0
        %v656 = vmax.f32 %v630, 0.0
        %v657 = vmax.f32 %v635, 0.0
        %v658 = vmax.f32 %v640, 0.0
        %s659 = scalar_lea.vmem [#allocation2], 256
        %v660 = vld [vmem:[%s659] sm:$0xff]
        %v661 = vld [vmem:[%s659 + $0x8] sm:$0xff]
        %v662 = vld [vmem:[%s659 + $0x10] sm:$0xff]
        %v663 = vld [vmem:[%s659 + $0x18] sm:$0xff]
        %v664 = vld [vmem:[%s659 + $0x20] sm:$0xff]
        %v665 = vld [vmem:[%s659 + $0x28] sm:$0xff]
        %v666 = vld [vmem:[%s659 + $0x30] sm:$0xff]
        %v667 = vld [vmem:[%s659 + $0x38] sm:$0xff]
        %v668 = vld [vmem:[%s659 + $0x40] sm:$0xff]
        %v669 = vld [vmem:[%s659 + $0x48] sm:$0xff]
        %v670 = vld [vmem:[%s659 + $0x50] sm:$0xff]
        %v671 = vld [vmem:[%s659 + $0x58] sm:$0xff]
        %v672 = vld [vmem:[%s659 + $0x60] sm:$0xff]
        %v673 = vld [vmem:[%s659 + $0x68] sm:$0xff]
        %v674 = vld [vmem:[%s659 + $0x70] sm:$0xff]
        %v675 = vld [vmem:[%s659 + $0x78] sm:$0xff]
        %s676 = scalar_lea.vmem %s3, 2
        %v677 = vld [vmem:[%s676] sm:$0x1]
        %v679 = vlaneseq
        %v680 = vshrl.u32 %v679, 7
        %v681 = vsub.s32 0, %v680
        %v682 = vrot.slane %v677, %v681
        %684 = vmatprep.subr.mxu0 0.0
        %685 = vmatpush1.msra.mxu0 %v660
        %686 = vmatprep.subr.mxu0 0.0
        %687 = vmatpush1.msra.mxu0 %v661
        %688 = vmatprep.subr.mxu0 0.0
        %689 = vmatpush1.msra.mxu0 %v662
        %690 = vmatprep.subr.mxu0 0.0
        %691 = vmatpush1.msra.mxu0 %v663
        %692 = vmatprep.subr.mxu0 0.0
        %693 = vmatpush1.msra.mxu0 %v664
        %694 = vmatprep.subr.mxu0 0.0
        %695 = vmatpush1.msra.mxu0 %v665
        %696 = vmatprep.subr.mxu0 0.0
        %697 = vmatpush1.msra.mxu0 %v666
        %698 = vmatprep.subr.mxu0 0.0
        %699 = vmatpush1.msra.mxu0 %v667
        %700 = vmatprep.subr.mxu0 0.0
        %701 = vmatpush1.msra.mxu0 %v668
        %702 = vmatprep.subr.mxu0 0.0
        %703 = vmatpush1.msra.mxu0 %v669
        %704 = vmatprep.subr.mxu0 0.0
        %705 = vmatpush1.msra.mxu0 %v670
        %706 = vmatprep.subr.mxu0 0.0
        %707 = vmatpush1.msra.mxu0 %v671
        %708 = vmatprep.subr.mxu0 0.0
        %709 = vmatpush1.msra.mxu0 %v672
        %710 = vmatprep.subr.mxu0 0.0
        %711 = vmatpush1.msra.mxu0 %v673
        %712 = vmatprep.subr.mxu0 0.0
        %713 = vmatpush1.msra.mxu0 %v674
        %714 = vmatprep.subr.mxu0 0.0
        %715 = vmatpush1.msra.mxu0 %v675
        %716 = vmatprep.subr.mxu0 0.0
        %717 = vmatpush1.msra.mxu0 0.0
        %718 = vmatprep.subr.mxu0 0.0
        %719 = vmatpush1.msra.mxu0 0.0
        %720 = vmatprep.subr.mxu0 0.0
        %721 = vmatpush1.msra.mxu0 0.0
        %722 = vmatprep.subr.mxu0 0.0
        %723 = vmatpush1.msra.mxu0 0.0
        %724 = vmatprep.subr.mxu0 0.0
        %725 = vmatpush1.msra.mxu0 0.0
        %726 = vmatprep.subr.mxu0 0.0
        %727 = vmatpush1.msra.mxu0 0.0
        %728 = vmatprep.subr.mxu0 0.0
        %729 = vmatpush1.msra.mxu0 0.0
        %730 = vmatprep.subr.mxu0 0.0
        %731 = vmatpush1.msra.mxu0 0.0
        %732 = vmatprep.subr.mxu0 0.0
        %733 = vmatpush1.msra.mxu0 0.0
        %734 = vmatprep.subr.mxu0 0.0
        %735 = vmatpush1.msra.mxu0 0.0
        %736 = vmatprep.subr.mxu0 0.0
        %737 = vmatpush1.msra.mxu0 0.0
        %738 = vmatprep.subr.mxu0 0.0
        %739 = vmatpush1.msra.mxu0 0.0
        %740 = vmatprep.subr.mxu0 0.0
        %741 = vmatpush1.msra.mxu0 0.0
        %742 = vmatprep.subr.mxu0 0.0
        %743 = vmatpush1.msra.mxu0 0.0
        %744 = vmatprep.subr.mxu0 0.0
        %745 = vmatpush1.msra.mxu0 0.0
        %746 = vmatprep.subr.mxu0 0.0
        %747 = vmatpush1.msra.mxu0 0.0
        %748 = vmatprep.mubr.f32.mxu0 0.0
        %749 = vmatmul.mubr.f32.gmra.mrb[0].mxu0 %v643
        %v750 = vpop.f32.mrb[0].mxu0
        %v751 = vadd.f32 %v682, %v750
        %v752 = vpop.f32.mrb[0].mxu0
        %753 = vmatprep.mubr.f32.mxu0 0.0
        %754 = vmatmul.mubr.f32.gmra.mrb[0].mxu0 %v644
        %v755 = vpop.f32.mrb[0].mxu0
        %v756 = vadd.f32 %v682, %v755
        %v757 = vpop.f32.mrb[0].mxu0
        %758 = vmatprep.mubr.f32.mxu0 0.0
        %759 = vmatmul.mubr.f32.gmra.mrb[0].mxu0 %v645
        %v760 = vpop.f32.mrb[0].mxu0
        %v761 = vadd.f32 %v682, %v760
        %v762 = vpop.f32.mrb[0].mxu0
        %763 = vmatprep.mubr.f32.mxu0 0.0
        %764 = vmatmul.mubr.f32.gmra.mrb[0].mxu0 %v646
        %v765 = vpop.f32.mrb[0].mxu0
        %v766 = vadd.f32 %v682, %v765
        %v767 = vpop.f32.mrb[0].mxu0
        %768 = vmatprep.mubr.f32.mxu0 0.0
        %769 = vmatmul.mubr.f32.gmra.mrb[0].mxu0 %v647
        %v770 = vpop.f32.mrb[0].mxu0
        %v771 = vadd.f32 %v682, %v770
        %v772 = vpop.f32.mrb[0].mxu0
        %773 = vmatprep.mubr.f32.mxu0 0.0
        %774 = vmatmul.mubr.f32.gmra.mrb[0].mxu0 %v648
        %v775 = vpop.f32.mrb[0].mxu0
        %v776 = vadd.f32 %v682, %v775
        %v777 = vpop.f32.mrb[0].mxu0
        %778 = vmatprep.mubr.f32.mxu0 0.0
        %779 = vmatmul.mubr.f32.gmra.mrb[0].mxu0 %v649
        %v780 = vpop.f32.mrb[0].mxu0
        %v781 = vadd.f32 %v682, %v780
        %v782 = vpop.f32.mrb[0].mxu0
        %783 = vmatprep.mubr.f32.mxu0 0.0
        %784 = vmatmul.mubr.f32.gmra.mrb[0].mxu0 %v650
        %v785 = vpop.f32.mrb[0].mxu0
        %v786 = vadd.f32 %v682, %v785
        %v787 = vpop.f32.mrb[0].mxu0
        %788 = vmatprep.mubr.f32.mxu0 0.0
        %789 = vmatmul.mubr.f32.gmra.mrb[0].mxu0 %v651
        %v790 = vpop.f32.mrb[0].mxu0
        %v791 = vadd.f32 %v682, %v790
        %v792 = vpop.f32.mrb[0].mxu0
        %793 = vmatprep.mubr.f32.mxu0 0.0
        %794 = vmatmul.mubr.f32.gmra.mrb[0].mxu0 %v652
        %v795 = vpop.f32.mrb[0].mxu0
        %v796 = vadd.f32 %v682, %v795
        %v797 = vpop.f32.mrb[0].mxu0
        %798 = vmatprep.mubr.f32.mxu0 0.0
        %799 = vmatmul.mubr.f32.gmra.mrb[0].mxu0 %v653
        %v800 = vpop.f32.mrb[0].mxu0
        %v801 = vadd.f32 %v682, %v800
        %v802 = vpop.f32.mrb[0].mxu0
        %803 = vmatprep.mubr.f32.mxu0 0.0
        %804 = vmatmul.mubr.f32.gmra.mrb[0].mxu0 %v654
        %v805 = vpop.f32.mrb[0].mxu0
        %v806 = vadd.f32 %v682, %v805
        %v807 = vpop.f32.mrb[0].mxu0
        %808 = vmatprep.mubr.f32.mxu0 0.0
        %809 = vmatmul.mubr.f32.gmra.mrb[0].mxu0 %v655
        %v810 = vpop.f32.mrb[0].mxu0
        %v811 = vadd.f32 %v682, %v810
        %v812 = vpop.f32.mrb[0].mxu0
        %813 = vmatprep.mubr.f32.mxu0 0.0
        %814 = vmatmul.mubr.f32.gmra.mrb[0].mxu0 %v656
        %v815 = vpop.f32.mrb[0].mxu0
        %v816 = vadd.f32 %v682, %v815
        %v817 = vpop.f32.mrb[0].mxu0
        %818 = vmatprep.mubr.f32.mxu0 0.0
        %819 = vmatmul.mubr.f32.gmra.mrb[0].mxu0 %v657
        %v820 = vpop.f32.mrb[0].mxu0
        %v821 = vadd.f32 %v682, %v820
        %v822 = vpop.f32.mrb[0].mxu0
        %823 = vmatprep.mubr.f32.mxu0 0.0
        %824 = vmatmul.mubr.f32.gmra.mrb[0].mxu0 %v658
        %v825 = vpop.f32.mrb[0].mxu0
        %v826 = vadd.f32 %v682, %v825
        %v827 = vpop.f32.mrb[0].mxu0
        %828 = vdwg.mxu0
        %v829 = vmax.f32 %v751, -4.0
        %v830 = vmax.f32 %v756, -4.0
        %v831 = vmax.f32 %v761, -4.0
        %v832 = vmax.f32 %v766, -4.0
        %v833 = vmax.f32 %v771, -4.0
        %v834 = vmax.f32 %v776, -4.0
        %v835 = vmax.f32 %v781, -4.0
        %v836 = vmax.f32 %v786, -4.0
        %v837 = vmax.f32 %v791, -4.0
        %v838 = vmax.f32 %v796, -4.0
        %v839 = vmax.f32 %v801, -4.0
        %v840 = vmax.f32 %v806, -4.0
        %v841 = vmax.f32 %v811, -4.0
        %v842 = vmax.f32 %v816, -4.0
        %v843 = vmax.f32 %v821, -4.0
        %v844 = vmax.f32 %v826, -4.0
        %v845 = vmin.f32 %v829, 4.0
        %v846 = vmin.f32 %v830, 4.0
        %v847 = vmin.f32 %v831, 4.0
        %v848 = vmin.f32 %v832, 4.0
        %v849 = vmin.f32 %v833, 4.0
        %v850 = vmin.f32 %v834, 4.0
        %v851 = vmin.f32 %v835, 4.0
        %v852 = vmin.f32 %v836, 4.0
        %v853 = vmin.f32 %v837, 4.0
        %v854 = vmin.f32 %v838, 4.0
        %v855 = vmin.f32 %v839, 4.0
        %v856 = vmin.f32 %v840, 4.0
        %v857 = vmin.f32 %v841, 4.0
        %v858 = vmin.f32 %v842, 4.0
        %v859 = vmin.f32 %v843, 4.0
        %v860 = vmin.f32 %v844, 4.0
        %v861 = vmul.f32 %v845, 1.442695
        %v862 = vpow.pop %v861
        %v863 = vmul.f32 %v846, 1.442695
        %v864 = vpow.pop %v863
        %v865 = vmul.f32 %v847, 1.442695
        %v866 = vpow.pop %v865
        %v867 = vmul.f32 %v848, 1.442695
        %v868 = vpow.pop %v867
        %v869 = vmul.f32 %v849, 1.442695
        %v870 = vpow.pop %v869
        %v871 = vmul.f32 %v850, 1.442695
        %v872 = vpow.pop %v871
        %v873 = vmul.f32 %v851, 1.442695
        %v874 = vpow.pop %v873
        %v875 = vmul.f32 %v852, 1.442695
        %v876 = vpow.pop %v875
        %v877 = vmul.f32 %v853, 1.442695
        %v878 = vpow.pop %v877
        %v879 = vmul.f32 %v854, 1.442695
        %v880 = vpow.pop %v879
        %v881 = vmul.f32 %v855, 1.442695
        %v882 = vpow.pop %v881
        %v883 = vmul.f32 %v856, 1.442695
        %v884 = vpow.pop %v883
        %v885 = vmul.f32 %v857, 1.442695
        %v886 = vpow.pop %v885
        %v887 = vmul.f32 %v858, 1.442695
        %v888 = vpow.pop %v887
        %v889 = vmul.f32 %v859, 1.442695
        %v890 = vpow.pop %v889
        %v891 = vmul.f32 %v860, 1.442695
        %v892 = vpow.pop %v891
        %v893 = vld [vmem:[%s230] sm:$0xff]
        %v894 = vld [vmem:[%s230 + $0x8] sm:$0xff]
        %v895 = vld [vmem:[%s230 + $0x10] sm:$0xff]
        %v896 = vld [vmem:[%s230 + $0x18] sm:$0xff]
        %v897 = vld [vmem:[%s230 + $0x20] sm:$0xff]
        %v898 = vld [vmem:[%s230 + $0x28] sm:$0xff]
        %v899 = vld [vmem:[%s230 + $0x30] sm:$0xff]
        %v900 = vld [vmem:[%s230 + $0x38] sm:$0xff]
        %v901 = vld [vmem:[%s230 + $0x40] sm:$0xff]
        %v902 = vld [vmem:[%s230 + $0x48] sm:$0xff]
        %v903 = vld [vmem:[%s230 + $0x50] sm:$0xff]
        %v904 = vld [vmem:[%s230 + $0x58] sm:$0xff]
        %v905 = vld [vmem:[%s230 + $0x60] sm:$0xff]
        %v906 = vld [vmem:[%s230 + $0x68] sm:$0xff]
        %v907 = vld [vmem:[%s230 + $0x70] sm:$0xff]
        %v908 = vld [vmem:[%s230 + $0x78] sm:$0xff]
        %925 = vrot.lane.b32.xlu0 %v893, 8
        %v926 = vpop.permute.xlu0 %925
        %927 = vrot.lane.b32.xlu0 %v894, 8
        %v928 = vpop.permute.xlu0 %927
        %929 = vrot.lane.b32.xlu0 %v895, 8
        %v930 = vpop.permute.xlu0 %929
        %931 = vrot.lane.b32.xlu0 %v896, 8
        %v932 = vpop.permute.xlu0 %931
        %933 = vrot.lane.b32.xlu0 %v897, 8
        %v934 = vpop.permute.xlu0 %933
        %935 = vrot.lane.b32.xlu0 %v898, 8
        %v936 = vpop.permute.xlu0 %935
        %937 = vrot.lane.b32.xlu0 %v899, 8
        %v938 = vpop.permute.xlu0 %937
        %939 = vrot.lane.b32.xlu0 %v900, 8
        %v940 = vpop.permute.xlu0 %939
        %941 = vrot.lane.b32.xlu0 %v901, 8
        %v942 = vpop.permute.xlu0 %941
        %943 = vrot.lane.b32.xlu0 %v902, 8
        %v944 = vpop.permute.xlu0 %943
        %945 = vrot.lane.b32.xlu0 %v903, 8
        %v946 = vpop.permute.xlu0 %945
        %947 = vrot.lane.b32.xlu0 %v904, 8
        %v948 = vpop.permute.xlu0 %947
        %949 = vrot.lane.b32.xlu0 %v905, 8
        %v950 = vpop.permute.xlu0 %949
        %951 = vrot.lane.b32.xlu0 %v906, 8
        %v952 = vpop.permute.xlu0 %951
        %953 = vrot.lane.b32.xlu0 %v907, 8
        %v954 = vpop.permute.xlu0 %953
        %955 = vrot.lane.b32.xlu0 %v908, 8
        %v956 = vpop.permute.xlu0 %955
        %v973 = vmul.f32 %v862, %v926
        %v974 = vmul.f32 %v864, %v928
        %v975 = vmul.f32 %v866, %v930
        %v976 = vmul.f32 %v868, %v932
        %v977 = vmul.f32 %v870, %v934
        %v978 = vmul.f32 %v872, %v936
        %v979 = vmul.f32 %v874, %v938
        %v980 = vmul.f32 %v876, %v940
        %v981 = vmul.f32 %v878, %v942
        %v982 = vmul.f32 %v880, %v944
        %v983 = vmul.f32 %v882, %v946
        %v984 = vmul.f32 %v884, %v948
        %v985 = vmul.f32 %v886, %v950
        %v986 = vmul.f32 %v888, %v952
        %v987 = vmul.f32 %v890, %v954
        %v988 = vmul.f32 %v892, %v956
        %1005 = vrot.lane.b32.xlu0 %v973, 120
        %v1006 = vpop.permute.xlu0 %1005
        %1007 = vrot.lane.b32.xlu0 %v974, 120
        %v1008 = vpop.permute.xlu0 %1007
        %1009 = vrot.lane.b32.xlu0 %v975, 120
        %v1010 = vpop.permute.xlu0 %1009
        %1011 = vrot.lane.b32.xlu0 %v976, 120
        %v1012 = vpop.permute.xlu0 %1011
        %1013 = vrot.lane.b32.xlu0 %v977, 120
        %v1014 = vpop.permute.xlu0 %1013
        %1015 = vrot.lane.b32.xlu0 %v978, 120
        %v1016 = vpop.permute.xlu0 %1015
        %1017 = vrot.lane.b32.xlu0 %v979, 120
        %v1018 = vpop.permute.xlu0 %1017
        %1019 = vrot.lane.b32.xlu0 %v980, 120
        %v1020 = vpop.permute.xlu0 %1019
        %1021 = vrot.lane.b32.xlu0 %v981, 120
        %v1022 = vpop.permute.xlu0 %1021
        %1023 = vrot.lane.b32.xlu0 %v982, 120
        %v1024 = vpop.permute.xlu0 %1023
        %1025 = vrot.lane.b32.xlu0 %v983, 120
        %v1026 = vpop.permute.xlu0 %1025
        %1027 = vrot.lane.b32.xlu0 %v984, 120
        %v1028 = vpop.permute.xlu0 %1027
        %1029 = vrot.lane.b32.xlu0 %v985, 120
        %v1030 = vpop.permute.xlu0 %1029
        %1031 = vrot.lane.b32.xlu0 %v986, 120
        %v1032 = vpop.permute.xlu0 %1031
        %1033 = vrot.lane.b32.xlu0 %v987, 120
        %v1034 = vpop.permute.xlu0 %1033
        %1035 = vrot.lane.b32.xlu0 %v988, 120
        %v1036 = vpop.permute.xlu0 %1035
        %v1053 = vadd.f32 %v751, %v1006
        %v1054 = vadd.f32 %v756, %v1008
        %v1055 = vadd.f32 %v761, %v1010
        %v1056 = vadd.f32 %v766, %v1012
        %v1057 = vadd.f32 %v771, %v1014
        %v1058 = vadd.f32 %v776, %v1016
        %v1059 = vadd.f32 %v781, %v1018
        %v1060 = vadd.f32 %v786, %v1020
        %v1061 = vadd.f32 %v791, %v1022
        %v1062 = vadd.f32 %v796, %v1024
        %v1063 = vadd.f32 %v801, %v1026
        %v1064 = vadd.f32 %v806, %v1028
        %v1065 = vadd.f32 %v811, %v1030
        %v1066 = vadd.f32 %v816, %v1032
        %v1067 = vadd.f32 %v821, %v1034
        %v1068 = vadd.f32 %v826, %v1036
        %s1069 = scalar_lea.vmem [#allocation2], 384
        %v1070 = vld [vmem:[%s1069] sm:$0xff]
        %s1071 = scalar_lea.vmem %s3, 3
        %v1072 = vld [vmem:[%s1071] sm:$0x1]
        %v1074 = vlaneseq
        %v1075 = vshrl.u32 %v1074, 7
        %v1076 = vsub.s32 0, %v1075
        %v1077 = vrot.slane %v1072, %v1076
        %vm1079 = vcmask 64512
        %v1081 = vsel %vm1079, %v1053, 0
        %v1084 = vsel %vm1079, %v1054, 0
        %v1087 = vsel %vm1079, %v1055, 0
        %v1090 = vsel %vm1079, %v1056, 0
        %v1093 = vsel %vm1079, %v1057, 0
        %v1096 = vsel %vm1079, %v1058, 0
        %v1099 = vsel %vm1079, %v1059, 0
        %v1102 = vsel %vm1079, %v1060, 0
        %v1105 = vsel %vm1079, %v1061, 0
        %v1108 = vsel %vm1079, %v1062, 0
        %v1111 = vsel %vm1079, %v1063, 0
        %v1114 = vsel %vm1079, %v1064, 0
        %v1117 = vsel %vm1079, %v1065, 0
        %v1120 = vsel %vm1079, %v1066, 0
        %v1123 = vsel %vm1079, %v1067, 0
        %v1126 = vsel %vm1079, %v1068, 0
        %1128 = vmatprep.subr.mxu0 0.0
        %1129 = vmatpush1.msra.mxu0 %v1070
        %1130 = vmatprep.subr.mxu0 0.0
        %1131 = vmatpush1.msra.mxu0 0.0
        %1132 = vmatprep.subr.mxu0 0.0
        %1133 = vmatpush1.msra.mxu0 0.0
        %1134 = vmatprep.subr.mxu0 0.0
        %1135 = vmatpush1.msra.mxu0 0.0
        %1136 = vmatprep.subr.mxu0 0.0
        %1137 = vmatpush1.msra.mxu0 0.0
        %1138 = vmatprep.subr.mxu0 0.0
        %1139 = vmatpush1.msra.mxu0 0.0
        %1140 = vmatprep.subr.mxu0 0.0
        %1141 = vmatpush1.msra.mxu0 0.0
        %1142 = vmatprep.subr.mxu0 0.0
        %1143 = vmatpush1.msra.mxu0 0.0
        %1144 = vmatprep.subr.mxu0 0.0
        %1145 = vmatpush1.msra.mxu0 0.0
        %1146 = vmatprep.subr.mxu0 0.0
        %1147 = vmatpush1.msra.mxu0 0.0
        %1148 = vmatprep.subr.mxu0 0.0
        %1149 = vmatpush1.msra.mxu0 0.0
        %1150 = vmatprep.subr.mxu0 0.0
        %1151 = vmatpush1.msra.mxu0 0.0
        %1152 = vmatprep.subr.mxu0 0.0
        %1153 = vmatpush1.msra.mxu0 0.0
        %1154 = vmatprep.subr.mxu0 0.0
        %1155 = vmatpush1.msra.mxu0 0.0
        %1156 = vmatprep.subr.mxu0 0.0
        %1157 = vmatpush1.msra.mxu0 0.0
        %1158 = vmatprep.subr.mxu0 0.0
        %1159 = vmatpush1.msra.mxu0 0.0
        %1160 = vmatprep.subr.mxu0 0.0
        %1161 = vmatpush1.msra.mxu0 0.0
        %1162 = vmatprep.subr.mxu0 0.0
        %1163 = vmatpush1.msra.mxu0 0.0
        %1164 = vmatprep.subr.mxu0 0.0
        %1165 = vmatpush1.msra.mxu0 0.0
        %1166 = vmatprep.subr.mxu0 0.0
        %1167 = vmatpush1.msra.mxu0 0.0
        %1168 = vmatprep.subr.mxu0 0.0
        %1169 = vmatpush1.msra.mxu0 0.0
        %1170 = vmatprep.subr.mxu0 0.0
        %1171 = vmatpush1.msra.mxu0 0.0
        %1172 = vmatprep.subr.mxu0 0.0
        %1173 = vmatpush1.msra.mxu0 0.0
        %1174 = vmatprep.subr.mxu0 0.0
        %1175 = vmatpush1.msra.mxu0 0.0
        %1176 = vmatprep.subr.mxu0 0.0
        %1177 = vmatpush1.msra.mxu0 0.0
        %1178 = vmatprep.subr.mxu0 0.0
        %1179 = vmatpush1.msra.mxu0 0.0
        %1180 = vmatprep.subr.mxu0 0.0
        %1181 = vmatpush1.msra.mxu0 0.0
        %1182 = vmatprep.subr.mxu0 0.0
        %1183 = vmatpush1.msra.mxu0 0.0
        %1184 = vmatprep.subr.mxu0 0.0
        %1185 = vmatpush1.msra.mxu0 0.0
        %1186 = vmatprep.subr.mxu0 0.0
        %1187 = vmatpush1.msra.mxu0 0.0
        %1188 = vmatprep.subr.mxu0 0.0
        %1189 = vmatpush1.msra.mxu0 0.0
        %1190 = vmatprep.subr.mxu0 0.0
        %1191 = vmatpush1.msra.mxu0 0.0
        %1192 = vmatprep.mubr.f32.mxu0 0.0
        %1193 = vmatmul.mubr.f32.gmra.mrb[0].mxu0 %v1081
        %v1194 = vpop.f32.mrb[0].mxu0
        %v1195 = vadd.f32 %v1077, %v1194
        %v1196 = vpop.f32.mrb[0].mxu0
        %1197 = vmatprep.mubr.f32.mxu0 0.0
        %1198 = vmatmul.mubr.f32.gmra.mrb[0].mxu0 %v1084
        %v1199 = vpop.f32.mrb[0].mxu0
        %v1200 = vadd.f32 %v1077, %v1199
        %v1201 = vpop.f32.mrb[0].mxu0
        %1202 = vmatprep.mubr.f32.mxu0 0.0
        %1203 = vmatmul.mubr.f32.gmra.mrb[0].mxu0 %v1087
        %v1204 = vpop.f32.mrb[0].mxu0
        %v1205 = vadd.f32 %v1077, %v1204
        %v1206 = vpop.f32.mrb[0].mxu0
        %1207 = vmatprep.mubr.f32.mxu0 0.0
        %1208 = vmatmul.mubr.f32.gmra.mrb[0].mxu0 %v1090
        %v1209 = vpop.f32.mrb[0].mxu0
        %v1210 = vadd.f32 %v1077, %v1209
        %v1211 = vpop.f32.mrb[0].mxu0
        %1212 = vmatprep.mubr.f32.mxu0 0.0
        %1213 = vmatmul.mubr.f32.gmra.mrb[0].mxu0 %v1093
        %v1214 = vpop.f32.mrb[0].mxu0
        %v1215 = vadd.f32 %v1077, %v1214
        %v1216 = vpop.f32.mrb[0].mxu0
        %1217 = vmatprep.mubr.f32.mxu0 0.0
        %1218 = vmatmul.mubr.f32.gmra.mrb[0].mxu0 %v1096
        %v1219 = vpop.f32.mrb[0].mxu0
        %v1220 = vadd.f32 %v1077, %v1219
        %v1221 = vpop.f32.mrb[0].mxu0
        %1222 = vmatprep.mubr.f32.mxu0 0.0
        %1223 = vmatmul.mubr.f32.gmra.mrb[0].mxu0 %v1099
        %v1224 = vpop.f32.mrb[0].mxu0
        %v1225 = vadd.f32 %v1077, %v1224
        %v1226 = vpop.f32.mrb[0].mxu0
        %1227 = vmatprep.mubr.f32.mxu0 0.0
        %1228 = vmatmul.mubr.f32.gmra.mrb[0].mxu0 %v1102
        %v1229 = vpop.f32.mrb[0].mxu0
        %v1230 = vadd.f32 %v1077, %v1229
        %v1231 = vpop.f32.mrb[0].mxu0
        %1232 = vmatprep.mubr.f32.mxu0 0.0
        %1233 = vmatmul.mubr.f32.gmra.mrb[0].mxu0 %v1105
        %v1234 = vpop.f32.mrb[0].mxu0
        %v1235 = vadd.f32 %v1077, %v1234
        %v1236 = vpop.f32.mrb[0].mxu0
        %1237 = vmatprep.mubr.f32.mxu0 0.0
        %1238 = vmatmul.mubr.f32.gmra.mrb[0].mxu0 %v1108
        %v1239 = vpop.f32.mrb[0].mxu0
        %v1240 = vadd.f32 %v1077, %v1239
        %v1241 = vpop.f32.mrb[0].mxu0
        %1242 = vmatprep.mubr.f32.mxu0 0.0
        %1243 = vmatmul.mubr.f32.gmra.mrb[0].mxu0 %v1111
        %v1244 = vpop.f32.mrb[0].mxu0
        %v1245 = vadd.f32 %v1077, %v1244
        %v1246 = vpop.f32.mrb[0].mxu0
        %1247 = vmatprep.mubr.f32.mxu0 0.0
        %1248 = vmatmul.mubr.f32.gmra.mrb[0].mxu0 %v1114
        %v1249 = vpop.f32.mrb[0].mxu0
        %v1250 = vadd.f32 %v1077, %v1249
        %v1251 = vpop.f32.mrb[0].mxu0
        %1252 = vmatprep.mubr.f32.mxu0 0.0
        %1253 = vmatmul.mubr.f32.gmra.mrb[0].mxu0 %v1117
        %v1254 = vpop.f32.mrb[0].mxu0
        %v1255 = vadd.f32 %v1077, %v1254
        %v1256 = vpop.f32.mrb[0].mxu0
        %1257 = vmatprep.mubr.f32.mxu0 0.0
        %1258 = vmatmul.mubr.f32.gmra.mrb[0].mxu0 %v1120
        %v1259 = vpop.f32.mrb[0].mxu0
        %v1260 = vadd.f32 %v1077, %v1259
        %v1261 = vpop.f32.mrb[0].mxu0
        %1262 = vmatprep.mubr.f32.mxu0 0.0
        %1263 = vmatmul.mubr.f32.gmra.mrb[0].mxu0 %v1123
        %v1264 = vpop.f32.mrb[0].mxu0
        %v1265 = vadd.f32 %v1077, %v1264
        %v1266 = vpop.f32.mrb[0].mxu0
        %1267 = vmatprep.mubr.f32.mxu0 0.0
        %1268 = vmatmul.mubr.f32.gmra.mrb[0].mxu0 %v1126
        %v1269 = vpop.f32.mrb[0].mxu0
        %v1270 = vadd.f32 %v1077, %v1269
        %v1271 = vpop.f32.mrb[0].mxu0
        %1272 = vdwg.mxu0
        %v1273 = vmax.f32 %v1195, 0.0
        %v1274 = vmax.f32 %v1200, 0.0
        %v1275 = vmax.f32 %v1205, 0.0
        %v1276 = vmax.f32 %v1210, 0.0
        %v1277 = vmax.f32 %v1215, 0.0
        %v1278 = vmax.f32 %v1220, 0.0
        %v1279 = vmax.f32 %v1225, 0.0
        %v1280 = vmax.f32 %v1230, 0.0
        %v1281 = vmax.f32 %v1235, 0.0
        %v1282 = vmax.f32 %v1240, 0.0
        %v1283 = vmax.f32 %v1245, 0.0
        %v1284 = vmax.f32 %v1250, 0.0
        %v1285 = vmax.f32 %v1255, 0.0
        %v1286 = vmax.f32 %v1260, 0.0
        %v1287 = vmax.f32 %v1265, 0.0
        %v1288 = vmax.f32 %v1270, 0.0
        %s1289 = scalar_lea.vmem [#allocation2], 512
        %v1290 = vld [vmem:[%s1289] sm:$0xff]
        %v1291 = vld [vmem:[%s1289 + $0x8] sm:$0xff]
        %v1292 = vld [vmem:[%s1289 + $0x10] sm:$0xff]
        %v1293 = vld [vmem:[%s1289 + $0x18] sm:$0xff]
        %v1294 = vld [vmem:[%s1289 + $0x20] sm:$0xff]
        %v1295 = vld [vmem:[%s1289 + $0x28] sm:$0xff]
        %v1296 = vld [vmem:[%s1289 + $0x30] sm:$0xff]
        %v1297 = vld [vmem:[%s1289 + $0x38] sm:$0xff]
        %v1298 = vld [vmem:[%s1289 + $0x40] sm:$0xff]
        %v1299 = vld [vmem:[%s1289 + $0x48] sm:$0xff]
        %v1300 = vld [vmem:[%s1289 + $0x50] sm:$0xff]
        %v1301 = vld [vmem:[%s1289 + $0x58] sm:$0xff]
        %v1302 = vld [vmem:[%s1289 + $0x60] sm:$0xff]
        %v1303 = vld [vmem:[%s1289 + $0x68] sm:$0xff]
        %v1304 = vld [vmem:[%s1289 + $0x70] sm:$0xff]
        %v1305 = vld [vmem:[%s1289 + $0x78] sm:$0xff]
        %s1306 = scalar_lea.vmem %s3, 4
        %v1307 = vld [vmem:[%s1306] sm:$0x1]
        %v1309 = vlaneseq
        %v1310 = vshrl.u32 %v1309, 7
        %v1311 = vsub.s32 0, %v1310
        %v1312 = vrot.slane %v1307, %v1311
        %1314 = vmatprep.subr.mxu0 0.0
        %1315 = vmatpush1.msra.mxu0 %v1290
        %1316 = vmatprep.subr.mxu0 0.0
        %1317 = vmatpush1.msra.mxu0 %v1291
        %1318 = vmatprep.subr.mxu0 0.0
        %1319 = vmatpush1.msra.mxu0 %v1292
        %1320 = vmatprep.subr.mxu0 0.0
        %1321 = vmatpush1.msra.mxu0 %v1293
        %1322 = vmatprep.subr.mxu0 0.0
        %1323 = vmatpush1.msra.mxu0 %v1294
        %1324 = vmatprep.subr.mxu0 0.0
        %1325 = vmatpush1.msra.mxu0 %v1295
        %1326 = vmatprep.subr.mxu0 0.0
        %1327 = vmatpush1.msra.mxu0 %v1296
        %1328 = vmatprep.subr.mxu0 0.0
        %1329 = vmatpush1.msra.mxu0 %v1297
        %1330 = vmatprep.subr.mxu0 0.0
        %1331 = vmatpush1.msra.mxu0 %v1298
        %1332 = vmatprep.subr.mxu0 0.0
        %1333 = vmatpush1.msra.mxu0 %v1299
        %1334 = vmatprep.subr.mxu0 0.0
        %1335 = vmatpush1.msra.mxu0 %v1300
        %1336 = vmatprep.subr.mxu0 0.0
        %1337 = vmatpush1.msra.mxu0 %v1301
        %1338 = vmatprep.subr.mxu0 0.0
        %1339 = vmatpush1.msra.mxu0 %v1302
        %1340 = vmatprep.subr.mxu0 0.0
        %1341 = vmatpush1.msra.mxu0 %v1303
        %1342 = vmatprep.subr.mxu0 0.0
        %1343 = vmatpush1.msra.mxu0 %v1304
        %1344 = vmatprep.subr.mxu0 0.0
        %1345 = vmatpush1.msra.mxu0 %v1305
        %1346 = vmatprep.subr.mxu0 0.0
        %1347 = vmatpush1.msra.mxu0 0.0
        %1348 = vmatprep.subr.mxu0 0.0
        %1349 = vmatpush1.msra.mxu0 0.0
        %1350 = vmatprep.subr.mxu0 0.0
        %1351 = vmatpush1.msra.mxu0 0.0
        %1352 = vmatprep.subr.mxu0 0.0
        %1353 = vmatpush1.msra.mxu0 0.0
        %1354 = vmatprep.subr.mxu0 0.0
        %1355 = vmatpush1.msra.mxu0 0.0
        %1356 = vmatprep.subr.mxu0 0.0
        %1357 = vmatpush1.msra.mxu0 0.0
        %1358 = vmatprep.subr.mxu0 0.0
        %1359 = vmatpush1.msra.mxu0 0.0
        %1360 = vmatprep.subr.mxu0 0.0
        %1361 = vmatpush1.msra.mxu0 0.0
        %1362 = vmatprep.subr.mxu0 0.0
        %1363 = vmatpush1.msra.mxu0 0.0
        %1364 = vmatprep.subr.mxu0 0.0
        %1365 = vmatpush1.msra.mxu0 0.0
        %1366 = vmatprep.subr.mxu0 0.0
        %1367 = vmatpush1.msra.mxu0 0.0
        %1368 = vmatprep.subr.mxu0 0.0
        %1369 = vmatpush1.msra.mxu0 0.0
        %1370 = vmatprep.subr.mxu0 0.0
        %1371 = vmatpush1.msra.mxu0 0.0
        %1372 = vmatprep.subr.mxu0 0.0
        %1373 = vmatpush1.msra.mxu0 0.0
        %1374 = vmatprep.subr.mxu0 0.0
        %1375 = vmatpush1.msra.mxu0 0.0
        %1376 = vmatprep.subr.mxu0 0.0
        %1377 = vmatpush1.msra.mxu0 0.0
        %1378 = vmatprep.mubr.f32.mxu0 0.0
        %1379 = vmatmul.mubr.f32.gmra.mrb[0].mxu0 %v1273
        %v1380 = vpop.f32.mrb[0].mxu0
        %v1381 = vadd.f32 %v1312, %v1380
        %v1382 = vpop.f32.mrb[0].mxu0
        %1383 = vmatprep.mubr.f32.mxu0 0.0
        %1384 = vmatmul.mubr.f32.gmra.mrb[0].mxu0 %v1274
        %v1385 = vpop.f32.mrb[0].mxu0
        %v1386 = vadd.f32 %v1312, %v1385
        %v1387 = vpop.f32.mrb[0].mxu0
        %1388 = vmatprep.mubr.f32.mxu0 0.0
        %1389 = vmatmul.mubr.f32.gmra.mrb[0].mxu0 %v1275
        %v1390 = vpop.f32.mrb[0].mxu0
        %v1391 = vadd.f32 %v1312, %v1390
        %v1392 = vpop.f32.mrb[0].mxu0
        %1393 = vmatprep.mubr.f32.mxu0 0.0
        %1394 = vmatmul.mubr.f32.gmra.mrb[0].mxu0 %v1276
        %v1395 = vpop.f32.mrb[0].mxu0
        %v1396 = vadd.f32 %v1312, %v1395
        %v1397 = vpop.f32.mrb[0].mxu0
        %1398 = vmatprep.mubr.f32.mxu0 0.0
        %1399 = vmatmul.mubr.f32.gmra.mrb[0].mxu0 %v1277
        %v1400 = vpop.f32.mrb[0].mxu0
        %v1401 = vadd.f32 %v1312, %v1400
        %v1402 = vpop.f32.mrb[0].mxu0
        %1403 = vmatprep.mubr.f32.mxu0 0.0
        %1404 = vmatmul.mubr.f32.gmra.mrb[0].mxu0 %v1278
        %v1405 = vpop.f32.mrb[0].mxu0
        %v1406 = vadd.f32 %v1312, %v1405
        %v1407 = vpop.f32.mrb[0].mxu0
        %1408 = vmatprep.mubr.f32.mxu0 0.0
        %1409 = vmatmul.mubr.f32.gmra.mrb[0].mxu0 %v1279
        %v1410 = vpop.f32.mrb[0].mxu0
        %v1411 = vadd.f32 %v1312, %v1410
        %v1412 = vpop.f32.mrb[0].mxu0
        %1413 = vmatprep.mubr.f32.mxu0 0.0
        %1414 = vmatmul.mubr.f32.gmra.mrb[0].mxu0 %v1280
        %v1415 = vpop.f32.mrb[0].mxu0
        %v1416 = vadd.f32 %v1312, %v1415
        %v1417 = vpop.f32.mrb[0].mxu0
        %1418 = vmatprep.mubr.f32.mxu0 0.0
        %1419 = vmatmul.mubr.f32.gmra.mrb[0].mxu0 %v1281
        %v1420 = vpop.f32.mrb[0].mxu0
        %v1421 = vadd.f32 %v1312, %v1420
        %v1422 = vpop.f32.mrb[0].mxu0
        %1423 = vmatprep.mubr.f32.mxu0 0.0
        %1424 = vmatmul.mubr.f32.gmra.mrb[0].mxu0 %v1282
        %v1425 = vpop.f32.mrb[0].mxu0
        %v1426 = vadd.f32 %v1312, %v1425
        %v1427 = vpop.f32.mrb[0].mxu0
        %1428 = vmatprep.mubr.f32.mxu0 0.0
        %1429 = vmatmul.mubr.f32.gmra.mrb[0].mxu0 %v1283
        %v1430 = vpop.f32.mrb[0].mxu0
        %v1431 = vadd.f32 %v1312, %v1430
        %v1432 = vpop.f32.mrb[0].mxu0
        %1433 = vmatprep.mubr.f32.mxu0 0.0
        %1434 = vmatmul.mubr.f32.gmra.mrb[0].mxu0 %v1284
        %v1435 = vpop.f32.mrb[0].mxu0
        %v1436 = vadd.f32 %v1312, %v1435
        %v1437 = vpop.f32.mrb[0].mxu0
        %1438 = vmatprep.mubr.f32.mxu0 0.0
        %1439 = vmatmul.mubr.f32.gmra.mrb[0].mxu0 %v1285
        %v1440 = vpop.f32.mrb[0].mxu0
        %v1441 = vadd.f32 %v1312, %v1440
        %v1442 = vpop.f32.mrb[0].mxu0
        %1443 = vmatprep.mubr.f32.mxu0 0.0
        %1444 = vmatmul.mubr.f32.gmra.mrb[0].mxu0 %v1286
        %v1445 = vpop.f32.mrb[0].mxu0
        %v1446 = vadd.f32 %v1312, %v1445
        %v1447 = vpop.f32.mrb[0].mxu0
        %1448 = vmatprep.mubr.f32.mxu0 0.0
        %1449 = vmatmul.mubr.f32.gmra.mrb[0].mxu0 %v1287
        %v1450 = vpop.f32.mrb[0].mxu0
        %v1451 = vadd.f32 %v1312, %v1450
        %v1452 = vpop.f32.mrb[0].mxu0
        %1453 = vmatprep.mubr.f32.mxu0 0.0
        %1454 = vmatmul.mubr.f32.gmra.mrb[0].mxu0 %v1288
        %v1455 = vpop.f32.mrb[0].mxu0
        %v1456 = vadd.f32 %v1312, %v1455
        %v1457 = vpop.f32.mrb[0].mxu0
        %1458 = vdwg.mxu0
        %v1459 = vmax.f32 %v1381, 0.0
        %v1460 = vmax.f32 %v1386, 0.0
        %v1461 = vmax.f32 %v1391, 0.0
        %v1462 = vmax.f32 %v1396, 0.0
        %v1463 = vmax.f32 %v1401, 0.0
        %v1464 = vmax.f32 %v1406, 0.0
        %v1465 = vmax.f32 %v1411, 0.0
        %v1466 = vmax.f32 %v1416, 0.0
        %v1467 = vmax.f32 %v1421, 0.0
        %v1468 = vmax.f32 %v1426, 0.0
        %v1469 = vmax.f32 %v1431, 0.0
        %v1470 = vmax.f32 %v1436, 0.0
        %v1471 = vmax.f32 %v1441, 0.0
        %v1472 = vmax.f32 %v1446, 0.0
        %v1473 = vmax.f32 %v1451, 0.0
        %v1474 = vmax.f32 %v1456, 0.0
        %s1475 = scalar_lea.vmem [#allocation2], 640
        %v1476 = vld [vmem:[%s1475] sm:$0xff]
        %v1477 = vld [vmem:[%s1475 + $0x8] sm:$0xff]
        %v1478 = vld [vmem:[%s1475 + $0x10] sm:$0xff]
        %v1479 = vld [vmem:[%s1475 + $0x18] sm:$0xff]
        %v1480 = vld [vmem:[%s1475 + $0x20] sm:$0xff]
        %v1481 = vld [vmem:[%s1475 + $0x28] sm:$0xff]
        %v1482 = vld [vmem:[%s1475 + $0x30] sm:$0xff]
        %v1483 = vld [vmem:[%s1475 + $0x38] sm:$0xff]
        %v1484 = vld [vmem:[%s1475 + $0x40] sm:$0xff]
        %v1485 = vld [vmem:[%s1475 + $0x48] sm:$0xff]
        %v1486 = vld [vmem:[%s1475 + $0x50] sm:$0xff]
        %v1487 = vld [vmem:[%s1475 + $0x58] sm:$0xff]
        %v1488 = vld [vmem:[%s1475 + $0x60] sm:$0xff]
        %v1489 = vld [vmem:[%s1475 + $0x68] sm:$0xff]
        %v1490 = vld [vmem:[%s1475 + $0x70] sm:$0xff]
        %v1491 = vld [vmem:[%s1475 + $0x78] sm:$0xff]
        %s1492 = scalar_lea.vmem %s3, 5
        %v1493 = vld [vmem:[%s1492] sm:$0x1]
        %v1495 = vlaneseq
        %v1496 = vshrl.u32 %v1495, 7
        %v1497 = vsub.s32 0, %v1496
        %v1498 = vrot.slane %v1493, %v1497
        %1500 = vmatprep.subr.mxu0 0.0
        %1501 = vmatpush1.msra.mxu0 %v1476
        %1502 = vmatprep.subr.mxu0 0.0
        %1503 = vmatpush1.msra.mxu0 %v1477
        %1504 = vmatprep.subr.mxu0 0.0
        %1505 = vmatpush1.msra.mxu0 %v1478
        %1506 = vmatprep.subr.mxu0 0.0
        %1507 = vmatpush1.msra.mxu0 %v1479
        %1508 = vmatprep.subr.mxu0 0.0
        %1509 = vmatpush1.msra.mxu0 %v1480
        %1510 = vmatprep.subr.mxu0 0.0
        %1511 = vmatpush1.msra.mxu0 %v1481
        %1512 = vmatprep.subr.mxu0 0.0
        %1513 = vmatpush1.msra.mxu0 %v1482
        %1514 = vmatprep.subr.mxu0 0.0
        %1515 = vmatpush1.msra.mxu0 %v1483
        %1516 = vmatprep.subr.mxu0 0.0
        %1517 = vmatpush1.msra.mxu0 %v1484
        %1518 = vmatprep.subr.mxu0 0.0
        %1519 = vmatpush1.msra.mxu0 %v1485
        %1520 = vmatprep.subr.mxu0 0.0
        %1521 = vmatpush1.msra.mxu0 %v1486
        %1522 = vmatprep.subr.mxu0 0.0
        %1523 = vmatpush1.msra.mxu0 %v1487
        %1524 = vmatprep.subr.mxu0 0.0
        %1525 = vmatpush1.msra.mxu0 %v1488
        %1526 = vmatprep.subr.mxu0 0.0
        %1527 = vmatpush1.msra.mxu0 %v1489
        %1528 = vmatprep.subr.mxu0 0.0
        %1529 = vmatpush1.msra.mxu0 %v1490
        %1530 = vmatprep.subr.mxu0 0.0
        %1531 = vmatpush1.msra.mxu0 %v1491
        %1532 = vmatprep.subr.mxu0 0.0
        %1533 = vmatpush1.msra.mxu0 0.0
        %1534 = vmatprep.subr.mxu0 0.0
        %1535 = vmatpush1.msra.mxu0 0.0
        %1536 = vmatprep.subr.mxu0 0.0
        %1537 = vmatpush1.msra.mxu0 0.0
        %1538 = vmatprep.subr.mxu0 0.0
        %1539 = vmatpush1.msra.mxu0 0.0
        %1540 = vmatprep.subr.mxu0 0.0
        %1541 = vmatpush1.msra.mxu0 0.0
        %1542 = vmatprep.subr.mxu0 0.0
        %1543 = vmatpush1.msra.mxu0 0.0
        %1544 = vmatprep.subr.mxu0 0.0
        %1545 = vmatpush1.msra.mxu0 0.0
        %1546 = vmatprep.subr.mxu0 0.0
        %1547 = vmatpush1.msra.mxu0 0.0
        %1548 = vmatprep.subr.mxu0 0.0
        %1549 = vmatpush1.msra.mxu0 0.0
        %1550 = vmatprep.subr.mxu0 0.0
        %1551 = vmatpush1.msra.mxu0 0.0
        %1552 = vmatprep.subr.mxu0 0.0
        %1553 = vmatpush1.msra.mxu0 0.0
        %1554 = vmatprep.subr.mxu0 0.0
        %1555 = vmatpush1.msra.mxu0 0.0
        %1556 = vmatprep.subr.mxu0 0.0
        %1557 = vmatpush1.msra.mxu0 0.0
        %1558 = vmatprep.subr.mxu0 0.0
        %1559 = vmatpush1.msra.mxu0 0.0
        %1560 = vmatprep.subr.mxu0 0.0
        %1561 = vmatpush1.msra.mxu0 0.0
        %1562 = vmatprep.subr.mxu0 0.0
        %1563 = vmatpush1.msra.mxu0 0.0
        %1564 = vmatprep.mubr.f32.mxu0 0.0
        %1565 = vmatmul.mubr.f32.gmra.mrb[0].mxu0 %v1459
        %v1566 = vpop.f32.mrb[0].mxu0
        %v1567 = vadd.f32 %v1498, %v1566
        %v1568 = vpop.f32.mrb[0].mxu0
        %1569 = vmatprep.mubr.f32.mxu0 0.0
        %1570 = vmatmul.mubr.f32.gmra.mrb[0].mxu0 %v1460
        %v1571 = vpop.f32.mrb[0].mxu0
        %v1572 = vadd.f32 %v1498, %v1571
        %v1573 = vpop.f32.mrb[0].mxu0
        %1574 = vmatprep.mubr.f32.mxu0 0.0
        %1575 = vmatmul.mubr.f32.gmra.mrb[0].mxu0 %v1461
        %v1576 = vpop.f32.mrb[0].mxu0
        %v1577 = vadd.f32 %v1498, %v1576
        %v1578 = vpop.f32.mrb[0].mxu0
        %1579 = vmatprep.mubr.f32.mxu0 0.0
        %1580 = vmatmul.mubr.f32.gmra.mrb[0].mxu0 %v1462
        %v1581 = vpop.f32.mrb[0].mxu0
        %v1582 = vadd.f32 %v1498, %v1581
        %v1583 = vpop.f32.mrb[0].mxu0
        %1584 = vmatprep.mubr.f32.mxu0 0.0
        %1585 = vmatmul.mubr.f32.gmra.mrb[0].mxu0 %v1463
        %v1586 = vpop.f32.mrb[0].mxu0
        %v1587 = vadd.f32 %v1498, %v1586
        %v1588 = vpop.f32.mrb[0].mxu0
        %1589 = vmatprep.mubr.f32.mxu0 0.0
        %1590 = vmatmul.mubr.f32.gmra.mrb[0].mxu0 %v1464
        %v1591 = vpop.f32.mrb[0].mxu0
        %v1592 = vadd.f32 %v1498, %v1591
        %v1593 = vpop.f32.mrb[0].mxu0
        %1594 = vmatprep.mubr.f32.mxu0 0.0
        %1595 = vmatmul.mubr.f32.gmra.mrb[0].mxu0 %v1465
        %v1596 = vpop.f32.mrb[0].mxu0
        %v1597 = vadd.f32 %v1498, %v1596
        %v1598 = vpop.f32.mrb[0].mxu0
        %1599 = vmatprep.mubr.f32.mxu0 0.0
        %1600 = vmatmul.mubr.f32.gmra.mrb[0].mxu0 %v1466
        %v1601 = vpop.f32.mrb[0].mxu0
        %v1602 = vadd.f32 %v1498, %v1601
        %v1603 = vpop.f32.mrb[0].mxu0
        %1604 = vmatprep.mubr.f32.mxu0 0.0
        %1605 = vmatmul.mubr.f32.gmra.mrb[0].mxu0 %v1467
        %v1606 = vpop.f32.mrb[0].mxu0
        %v1607 = vadd.f32 %v1498, %v1606
        %v1608 = vpop.f32.mrb[0].mxu0
        %1609 = vmatprep.mubr.f32.mxu0 0.0
        %1610 = vmatmul.mubr.f32.gmra.mrb[0].mxu0 %v1468
        %v1611 = vpop.f32.mrb[0].mxu0
        %v1612 = vadd.f32 %v1498, %v1611
        %v1613 = vpop.f32.mrb[0].mxu0
        %1614 = vmatprep.mubr.f32.mxu0 0.0
        %1615 = vmatmul.mubr.f32.gmra.mrb[0].mxu0 %v1469
        %v1616 = vpop.f32.mrb[0].mxu0
        %v1617 = vadd.f32 %v1498, %v1616
        %v1618 = vpop.f32.mrb[0].mxu0
        %1619 = vmatprep.mubr.f32.mxu0 0.0
        %1620 = vmatmul.mubr.f32.gmra.mrb[0].mxu0 %v1470
        %v1621 = vpop.f32.mrb[0].mxu0
        %v1622 = vadd.f32 %v1498, %v1621
        %v1623 = vpop.f32.mrb[0].mxu0
        %1624 = vmatprep.mubr.f32.mxu0 0.0
        %1625 = vmatmul.mubr.f32.gmra.mrb[0].mxu0 %v1471
        %v1626 = vpop.f32.mrb[0].mxu0
        %v1627 = vadd.f32 %v1498, %v1626
        %v1628 = vpop.f32.mrb[0].mxu0
        %1629 = vmatprep.mubr.f32.mxu0 0.0
        %1630 = vmatmul.mubr.f32.gmra.mrb[0].mxu0 %v1472
        %v1631 = vpop.f32.mrb[0].mxu0
        %v1632 = vadd.f32 %v1498, %v1631
        %v1633 = vpop.f32.mrb[0].mxu0
        %1634 = vmatprep.mubr.f32.mxu0 0.0
        %1635 = vmatmul.mubr.f32.gmra.mrb[0].mxu0 %v1473
        %v1636 = vpop.f32.mrb[0].mxu0
        %v1637 = vadd.f32 %v1498, %v1636
        %v1638 = vpop.f32.mrb[0].mxu0
        %1639 = vmatprep.mubr.f32.mxu0 0.0
        %1640 = vmatmul.mubr.f32.gmra.mrb[0].mxu0 %v1474
        %v1641 = vpop.f32.mrb[0].mxu0
        %v1642 = vadd.f32 %v1498, %v1641
        %v1643 = vpop.f32.mrb[0].mxu0
        %1644 = vdwg.mxu0
        %1645 = vst.msk [vmem:[%s236] sm:$0xff] %vm263, %v1567
        %1646 = vst.msk [vmem:[%s236 + $0x8] sm:$0xff] %vm263, %v1572
        %1647 = vst.msk [vmem:[%s236 + $0x10] sm:$0xff] %vm263, %v1577
        %1648 = vst.msk [vmem:[%s236 + $0x18] sm:$0xff] %vm263, %v1582
        %1649 = vst.msk [vmem:[%s236 + $0x20] sm:$0xff] %vm263, %v1587
        %1650 = vst.msk [vmem:[%s236 + $0x28] sm:$0xff] %vm263, %v1592
        %1651 = vst.msk [vmem:[%s236 + $0x30] sm:$0xff] %vm263, %v1597
        %1652 = vst.msk [vmem:[%s236 + $0x38] sm:$0xff] %vm263, %v1602
        %1653 = vst.msk [vmem:[%s236 + $0x40] sm:$0xff] %vm263, %v1607
        %1654 = vst.msk [vmem:[%s236 + $0x48] sm:$0xff] %vm263, %v1612
        %1655 = vst.msk [vmem:[%s236 + $0x50] sm:$0xff] %vm263, %v1617
        %1656 = vst.msk [vmem:[%s236 + $0x58] sm:$0xff] %vm263, %v1622
        %1657 = vst.msk [vmem:[%s236 + $0x60] sm:$0xff] %vm263, %v1627
        %1658 = vst.msk [vmem:[%s236 + $0x68] sm:$0xff] %vm263, %v1632
        %1659 = vst.msk [vmem:[%s236 + $0x70] sm:$0xff] %vm263, %v1637
        %1660 = vst.msk [vmem:[%s236 + $0x78] sm:$0xff] %vm263, %v1642
        %s1661 = smul.u32 16, %s16
        %p1662 = scmp.lt.s32.totalorder %s1661, 31
        %s1663 = scalar_select %p1662, %s1661, 31
        %s1664 = smul.addr %s1663, 8
        %s1665 = scalar_lea.vmem %s4, %s1664
        // Predicated region
        $region41: #{vanilla_vae_forward.1} parent=35 // pred_check
          %p1666 = pneg %p128
        $region42: #{vanilla_vae_forward.1} parent=35 // pred_check_branch
          %1668 = sbr.rel (%p1666) target = $region44
        $region43: #{vanilla_vae_forward.1} parent=35 // pred_region
          %s1669 = smul.u32 16, %s16
        $region44: #{vanilla_vae_forward.1} parent=35 // pred_fallthru
          _
      $region36: #{vanilla_vae_forward.1} parent=5 // pred_fallthru
        _
      %p1670 = scmp.le.s32.totalorder 2, %s11
      // Predicated region
      $region45: #{vanilla_vae_forward.1} parent=5 // pred_check
        %p1671 = pneg %p1670
      $region46: #{vanilla_vae_forward.1} parent=5 // pred_check_branch
        %1673 = sbr.rel (%p1671) target = $region48
      $region47: #{vanilla_vae_forward.1} parent=5 // pred_region
        %s1674 = ssub.s32 %s11, 2
        // Predicated region
        $region49: #{vanilla_vae_forward.1} parent=47 // pred_check
          %p1675 = pneg %p134
        $region50: #{vanilla_vae_forward.1} parent=47 // pred_check_branch
          %1677 = sbr.rel (%p1675) target = $region52
        $region51: #{vanilla_vae_forward.1} parent=47 // pred_region
          %s1678 = smul.u32 16, %s17
          %p1679 = scmp.lt.s32.totalorder %s1678, 31
          %s1680 = scalar_select %p1679, %s1678, 31
          %s1681 = smul.addr %s1680, 8
          %s1682 = scalar_lea.vmem %s4, %s1681
        $region52: #{vanilla_vae_forward.1} parent=47 // pred_fallthru
          _
      $region48: #{vanilla_vae_forward.1} parent=5 // pred_fallthru
        _
    $region6: #{vanilla_vae_forward.1} parent=1 // loop_footer
      %s15 = sadd.s32 1, %s11
    $region7: #{vanilla_vae_forward.1} parent=1 // loop_footer_branch
      %10 = sbr.rel target = $region3
    $region8: #{vanilla_vae_forward.1} parent=1 // loop_exit
      _
    %1683 = vsyncpa [#allocation3], 1
    %s1684 = scalar_lea.sflag [#allocation3], 1
    %1685 = vsyncpa %s1684, 1

</llo_original>
